<compile_context>
chip_gen: v7x
topology: tpu7x:2x2x1
jax: 0.10.0
libtpu: 0.0.40
codegen_flags: <defaults>
</compile_context>

<pallas_src>
import functools

import jax
import jax.numpy as jnp
import numpy as np
from jax.experimental import pallas as pl
from jax.experimental.pallas import tpu as pltpu

C_IN, C_OUT, K = 2, 10, 3
LANES = 128
TARGET_BLOCK_PIX = 1 << 16          # ~64K pixels per grid step

# SMEM coefficient layout: [interior | top-row | bottom-row], row-major per
# output channel.
_N_INT, _N_EDGE = 7, 4
_INT_OFF = 0
_TOP_OFF = C_OUT * _N_INT                      # 70
_BOT_OFF = _TOP_OFF + C_OUT * _N_EDGE          # 110
_N_COEF = _BOT_OFF + C_OUT * _N_EDGE           # 150


def _round_up(x, m):
    return ((x + m - 1) // m) * m


def _round_down(x, m):
    return (x // m) * m


def _coord_conv_coeffs(weight, bias, H, W):
    """Collapse Conv2d(2->10, 3x3, pad=1) over the analytic coord image into
    per-output affine coefficients (interior rows, top row, bottom row)."""
    w = weight.astype(jnp.float32)           # (C_OUT, 2, 3, 3), OIHW
    b = bias.astype(jnp.float32)             # (C_OUT,)
    ws = 2.0 / (W - 1) if W > 1 else 0.0     # torch.linspace(-1,1,n) step
    hs = 2.0 / (H - 1) if H > 1 else 0.0
    off = jnp.array([-1.0, 0.0, 1.0], jnp.float32)   # tap offset (k - 1)

    w0 = w[:, 0]                              # weights hitting w_coord (ch 0)
    w1 = w[:, 1]                              # weights hitting h_coord (ch 1)

    # Full (all taps in-bounds) affine form: A0*wq + A1*hq + G.
    A0 = w0.sum((1, 2))
    A1 = w1.sum((1, 2))
    G = b + ws * jnp.einsum('okl,l->o', w0, off) + hs * jnp.einsum('okl,k->o', w1, off)

    wq_l, wq_r = -1.0, -1.0 + (W - 1) * ws    # w_coord at columns 0 / W-1
    hq_t, hq_b = -1.0, -1.0 + (H - 1) * hs    # h_coord at rows    0 / H-1

    # Row-of-taps sums (kh = 0 missing at h==0, kh = 2 missing at h==H-1).
    Tw = w0[:, 0, :].sum(1)
    Tc = ws * (w0[:, 0, :] @ off) + w1[:, 0, :].sum(1) * (hq_t - hs)
    Bw = w0[:, 2, :].sum(1)
    Bc = ws * (w0[:, 2, :] @ off) + w1[:, 2, :].sum(1) * (hq_b + hs)
    # Column-of-taps sums (kw = 0 missing at w==0, kw = 2 missing at w==W-1),
    # evaluated at the only columns where they matter (wq is a constant there).
    Lh = w1[:, :, 0].sum(1)
    Lc = w0[:, :, 0].sum(1) * (wq_l - ws) + hs * (w1[:, :, 0] @ off)
    Rh = w1[:, :, 2].sum(1)
    Rc = w0[:, :, 2].sum(1) * (wq_r + ws) + hs * (w1[:, :, 2] @ off)
    # Corner taps (both row and column masked -> subtracted twice, add back).
    CTL = w0[:, 0, 0] * (wq_l - ws) + w1[:, 0, 0] * (hq_t - hs)
    CTR = w0[:, 0, 2] * (wq_r + ws) + w1[:, 0, 2] * (hq_t - hs)
    CBL = w0[:, 2, 0] * (wq_l - ws) + w1[:, 2, 0] * (hq_b + hs)
    CBR = w0[:, 2, 2] * (wq_r + ws) + w1[:, 2, 2] * (hq_b + hs)

    # H == 1: the single row is simultaneously the top and the bottom row.
    both = 1.0 if H == 1 else 0.0

    # Interior rows: v = A0*wq + A1*hq + G - ml*(Lh*hq+Lc) - mr*(Rh*hq+Rc).
    interior = jnp.stack([A0, A1, G, -Lh, -Lc, -Rh, -Rc], axis=1)       # (C_OUT, 7)
    # Top row (hq == hq_t is constant, so everything folds to affine-in-wq).
    top = jnp.stack([A0 - Tw - both * Bw,
                     A1 * hq_t + G - Tc - both * Bc,
                     -(Lh * hq_t + Lc) + CTL + both * CBL,
                     -(Rh * hq_t + Rc) + CTR + both * CBR], axis=1)      # (C_OUT, 4)
    # Bottom row.
    bot = jnp.stack([A0 - Bw - both * Tw,
                     A1 * hq_b + G - Bc - both * Tc,
                     -(Lh * hq_b + Lc) + CBL + both * CTL,
                     -(Rh * hq_b + Rc) + CBR + both * CTR], axis=1)      # (C_OUT, 4)

    return jnp.concatenate([interior.reshape(-1), top.reshape(-1), bot.reshape(-1)])


def coord_conv_kernel(coef_ref, o_ref, *, H, W, th, rb_last):
    """Collapsed CoordLayer conv for one (C_OUT, th, W_pad) row-block.

    coef_ref: SMEM (150,) f32 -- collapsed conv coefficients (see layout above)
    o_ref:    VMEM (C_OUT, th, W_pad) block, image rows [pid*th, pid*th + th)
    """
    pid = pl.program_id(0)
    Wp = o_ref.shape[2]

    lane = jax.lax.broadcasted_iota(jnp.int32, (th, Wp), 1)   # column index w
    sub = jax.lax.broadcasted_iota(jnp.int32, (th, Wp), 0)    # row within tile

    wstep = 2.0 / (W - 1) if W > 1 else 0.0
    hstep = 2.0 / (H - 1) if H > 1 else 0.0

    wq = -1.0 + lane.astype(jnp.float32) * wstep               # w_coord(w)
    hq = -1.0 + (pid * th + sub).astype(jnp.float32) * hstep   # h_coord(h)

    mlf = (lane == 0).astype(jnp.float32)        # left  image column indicator
    mrf = (lane == W - 1).astype(jnp.float32)    # right image column indicator
    mlh = mlf * hq                               # shared across all 10 outputs
    mrh = mrf * hq

    # Interior-row affine form; exact for every row except image rows 0 / H-1.
    # Padded lanes (w >= W) / padded rows (h >= H) get extrapolated values and
    # are sliced off by the wrapper.
    for o in range(C_OUT):
        c = _INT_OFF + o * _N_INT
        v = (coef_ref[c + 0] * wq + coef_ref[c + 1] * hq + coef_ref[c + 2]
             + coef_ref[c + 3] * mlh + coef_ref[c + 4] * mlf
             + coef_ref[c + 5] * mrh + coef_ref[c + 6] * mrf)
        o_ref[o] = jnp.maximum(v, 0.0).astype(o_ref.dtype)

    # Border-row fix-ups: the only rows whose window loses a tap row to the
    # zero padding.  Cheap (1, W_pad) recompute, gated to the first/last tile.
    wq_row, ml_row, mr_row = wq[0:1, :], mlf[0:1, :], mrf[0:1, :]

    def _edge_row(base_off, row):
        for o in range(C_OUT):
            c = base_off + o * _N_EDGE
            v = (coef_ref[c + 0] * wq_row + coef_ref[c + 1]
                 + coef_ref[c + 2] * ml_row + coef_ref[c + 3] * mr_row)
            o_ref[o, row:row + 1, :] = jnp.maximum(v, 0.0).astype(o_ref.dtype)

    @pl.when(pid == 0)
    def _():
        _edge_row(_TOP_OFF, 0)                       # image row h == 0

    @pl.when(pid == pl.num_programs(0) - 1)
    def _():
        _edge_row(_BOT_OFF, rb_last)                 # image row h == H-1


def coord_layer(x, weight, bias):
    """Pallas implementation of CoordLayer.forward.

    x:      (B, C, H, W)  -- only shape / dtype are used (matches torch)
    weight: (10, 2, 3, 3) -- Conv2d weight (OIHW)
    bias:   (10,)         -- Conv2d bias
    returns (B, 10, H, W) in x.dtype
    """
    B, _, H, W = x.shape
    dt = x.dtype

    W_pad = _round_up(W, LANES)
    # Rows per block: big enough to amortize per-grid-step overhead, multiple
    # of 8 for the (8,128) tiling rule, comfortably inside default scoped VMEM
    # on every TPU generation.
    th = max(8, min(_round_down(TARGET_BLOCK_PIX // W_pad, 8), _round_up(H, 8)))
    if H > 8:
        # Keep at least 2 row blocks so ("parallel",) shards across both v7x TCs.
        th = min(th, max(8, _round_up((H + 1) // 2, 8)))
    n_blocks = (H + th - 1) // th
    H_pad = n_blocks * th
    rb_last = (H - 1) - (n_blocks - 1) * th        # row H-1 inside the last tile

    coef = _coord_conv_coeffs(weight, bias, H, W)  # (150,) f32

    out = pl.pallas_call(
        functools.partial(coord_conv_kernel, H=H, W=W, th=th, rb_last=rb_last),
        out_shape=jax.ShapeDtypeStruct((C_OUT, H_pad, W_pad), dt),
        grid_spec=pltpu.PrefetchScalarGridSpec(
            num_scalar_prefetch=0,
            grid=(n_blocks,),
            in_specs=[pl.BlockSpec(memory_space=pltpu.MemorySpace.SMEM)],  # coeffs
            out_specs=pl.BlockSpec((C_OUT, th, W_pad), lambda i: (0, i, 0)),
        ),
        compiler_params=pltpu.CompilerParams(
            dimension_semantics=("parallel",)),
    )(coef)

    # Drop row/lane padding (a no-op when W % 128 == 0 and H % th == 0).
    if H_pad != H or W_pad != W:
        out = out[:, :H, :W]
    # Batch expand (torch .expand semantics).  The conv output is batch
    # independent; consumers that can fuse should use `out` directly, since
    # materializing B copies is the HBM roofline of this op.
    return jnp.broadcast_to(out[None], (B, C_OUT, H, W))


def reference_coord_layer(x, weight, bias):
    """Pure-JAX reference (lax conv) for verification."""
    B, _, H, W = x.shape
    w_lin = jnp.linspace(-1.0, 1.0, W, dtype=jnp.float32)
    h_lin = jnp.linspace(-1.0, 1.0, H, dtype=jnp.float32)
    coord = jnp.stack(
        [jnp.broadcast_to(w_lin[None, :], (H, W)),
         jnp.broadcast_to(h_lin[:, None], (H, W))], axis=0)[None]  # (1,2,H,W)
    y = jax.lax.conv_general_dilated(
        coord, weight.astype(jnp.float32),
        window_strides=(1, 1), padding=((1, 1), (1, 1)),
        dimension_numbers=("NCHW", "OIHW", "NCHW"),
    )[0] + bias.astype(jnp.float32)[:, None, None]
    y = jnp.maximum(y, 0.0).astype(x.dtype)
    return jnp.broadcast_to(y[None], (B, C_OUT, H, W))


if __name__ == "__main__":
    key = jax.random.PRNGKey(0)
    kx, kw, kb = jax.random.split(key, 3)

    # Small NCHW input consistent with the module (only shape/dtype used).
    B, C, H, W = 2, 4, 16, 16
    x = jax.random.normal(kx, (B, C, H, W), dtype=jnp.float32)

    # Deterministic synthetic Conv2d(2, 10, 3) parameters.
    fan_in = C_IN * K * K
    bound = 1.0 / np.sqrt(fan_in)
    weight = jax.random.uniform(kw, (C_OUT, C_IN, K, K), jnp.float32, -bound, bound)
    bias = jax.random.uniform(kb, (C_OUT,), jnp.float32, -bound, bound)

    out = jax.block_until_ready(coord_layer(x, weight, bias))
    ref = jax.block_until_ready(reference_coord_layer(x, weight, bias))

    assert out.shape == (B, C_OUT, H, W)
    np.testing.assert_allclose(np.asarray(out), np.asarray(ref), rtol=1e-5, atol=1e-5)

    print("KERNEL_OK")
</pallas_src>

<mosaic_0001>
module attributes {stable_mosaic.version = 11 : i64} {
  func.func @coord_conv_kernel(%arg0: i32, %arg1: memref<150xf32, #tpu.memory_space<smem>>, %arg2: memref<10x8x128xf32, #tpu.memory_space<vmem>>) attributes {dimension_semantics = [#tpu.dimension_semantics<parallel>], iteration_bounds = array<i64: 2>, scalar_prefetch = 0 : i64, scratch_operands = 0 : i64, tpu.core_type = #tpu.core_type<tc>, window_params = [{transform_indices = @transform_0, window_bounds = array<i64: 150>}, {transform_indices = @transform_1, window_bounds = array<i64: 10, 8, 128>}]} {
    %0 = tpu.iota {dimensions = array<i32: 1>} : vector<8x128xi32>
    %1 = tpu.iota {dimensions = array<i32: 0>} : vector<8x128xi32>
    %2 = arith.sitofp %0 : vector<8x128xi32> to vector<8x128xf32>
    %cst = arith.constant 0.13333334 : f32
    %3 = vector.broadcast %cst : f32 to vector<8x128xf32>
    %4 = arith.mulf %2, %3 : vector<8x128xf32>
    %cst_0 = arith.constant -1.000000e+00 : f32
    %5 = vector.broadcast %cst_0 : f32 to vector<8x128xf32>
    %6 = arith.addf %5, %4 : vector<8x128xf32>
    %c8_i32 = arith.constant 8 : i32
    %7 = arith.muli %arg0, %c8_i32 : i32
    %8 = vector.broadcast %7 : i32 to vector<8x128xi32>
    %9 = arith.addi %8, %1 : vector<8x128xi32>
    %10 = arith.sitofp %9 : vector<8x128xi32> to vector<8x128xf32>
    %cst_1 = arith.constant 0.13333334 : f32
    %11 = vector.broadcast %cst_1 : f32 to vector<8x128xf32>
    %12 = arith.mulf %10, %11 : vector<8x128xf32>
    %cst_2 = arith.constant -1.000000e+00 : f32
    %13 = vector.broadcast %cst_2 : f32 to vector<8x128xf32>
    %14 = arith.addf %13, %12 : vector<8x128xf32>
    %c0_i32 = arith.constant 0 : i32
    %15 = vector.broadcast %c0_i32 : i32 to vector<8x128xi32>
    %16 = arith.cmpi eq, %0, %15 : vector<8x128xi32>
    %17 = arith.extui %16 : vector<8x128xi1> to vector<8x128xi32>
    %18 = arith.sitofp %17 : vector<8x128xi32> to vector<8x128xf32>
    %c15_i32 = arith.constant 15 : i32
    %19 = vector.broadcast %c15_i32 : i32 to vector<8x128xi32>
    %20 = arith.cmpi eq, %0, %19 : vector<8x128xi32>
    %21 = arith.extui %20 : vector<8x128xi1> to vector<8x128xi32>
    %22 = arith.sitofp %21 : vector<8x128xi32> to vector<8x128xf32>
    %23 = arith.mulf %18, %14 : vector<8x128xf32>
    %24 = arith.mulf %22, %14 : vector<8x128xf32>
    %c0 = arith.constant 0 : index
    %25 = memref.load %arg1[%c0] : memref<150xf32, #tpu.memory_space<smem>>
    %26 = vector.broadcast %25 : f32 to vector<8x128xf32>
    %27 = arith.mulf %26, %6 : vector<8x128xf32>
    %c1 = arith.constant 1 : index
    %28 = memref.load %arg1[%c1] : memref<150xf32, #tpu.memory_space<smem>>
    %29 = vector.broadcast %28 : f32 to vector<8x128xf32>
    %30 = arith.mulf %29, %14 : vector<8x128xf32>
    %31 = arith.addf %27, %30 : vector<8x128xf32>
    %c2 = arith.constant 2 : index
    %32 = memref.load %arg1[%c2] : memref<150xf32, #tpu.memory_space<smem>>
    %33 = vector.broadcast %32 : f32 to vector<8x128xf32>
    %34 = arith.addf %31, %33 : vector<8x128xf32>
    %c3 = arith.constant 3 : index
    %35 = memref.load %arg1[%c3] : memref<150xf32, #tpu.memory_space<smem>>
    %36 = vector.broadcast %35 : f32 to vector<8x128xf32>
    %37 = arith.mulf %36, %23 : vector<8x128xf32>
    %38 = arith.addf %34, %37 : vector<8x128xf32>
    %c4 = arith.constant 4 : index
    %39 = memref.load %arg1[%c4] : memref<150xf32, #tpu.memory_space<smem>>
    %40 = vector.broadcast %39 : f32 to vector<8x128xf32>
    %41 = arith.mulf %40, %18 : vector<8x128xf32>
    %42 = arith.addf %38, %41 : vector<8x128xf32>
    %c5 = arith.constant 5 : index
    %43 = memref.load %arg1[%c5] : memref<150xf32, #tpu.memory_space<smem>>
    %44 = vector.broadcast %43 : f32 to vector<8x128xf32>
    %45 = arith.mulf %44, %24 : vector<8x128xf32>
    %46 = arith.addf %42, %45 : vector<8x128xf32>
    %c6 = arith.constant 6 : index
    %47 = memref.load %arg1[%c6] : memref<150xf32, #tpu.memory_space<smem>>
    %48 = vector.broadcast %47 : f32 to vector<8x128xf32>
    %49 = arith.mulf %48, %22 : vector<8x128xf32>
    %50 = arith.addf %46, %49 : vector<8x128xf32>
    %cst_3 = arith.constant 0.000000e+00 : f32
    %51 = vector.broadcast %cst_3 : f32 to vector<8x128xf32>
    %52 = arith.maximumf %50, %51 : vector<8x128xf32>
    %c0_4 = arith.constant 0 : index
    %c0_5 = arith.constant 0 : index
    %c0_6 = arith.constant 0 : index
    %53 = vector.load %arg2[%c0_4, %c0_5, %c0_6] : memref<10x8x128xf32, #tpu.memory_space<vmem>>, vector<1x8x128xf32>
    %54 = vector.shape_cast %53 : vector<1x8x128xf32> to vector<8x128xf32>
    %55 = vector.shape_cast %52 : vector<8x128xf32> to vector<1x8x128xf32>
    tpu.vector_store %arg2[%c0_4, %c0_5, %c0_6], %55 {strides = array<i32>} : memref<10x8x128xf32, #tpu.memory_space<vmem>>, vector<1x8x128xf32>,
    %c7 = arith.constant 7 : index
    %56 = memref.load %arg1[%c7] : memref<150xf32, #tpu.memory_space<smem>>
    %57 = vector.broadcast %56 : f32 to vector<8x128xf32>
    %58 = arith.mulf %57, %6 : vector<8x128xf32>
    %c8 = arith.constant 8 : index
    %59 = memref.load %arg1[%c8] : memref<150xf32, #tpu.memory_space<smem>>
    %60 = vector.broadcast %59 : f32 to vector<8x128xf32>
    %61 = arith.mulf %60, %14 : vector<8x128xf32>
    %62 = arith.addf %58, %61 : vector<8x128xf32>
    %c9 = arith.constant 9 : index
    %63 = memref.load %arg1[%c9] : memref<150xf32, #tpu.memory_space<smem>>
    %64 = vector.broadcast %63 : f32 to vector<8x128xf32>
    %65 = arith.addf %62, %64 : vector<8x128xf32>
    %c10 = arith.constant 10 : index
    %66 = memref.load %arg1[%c10] : memref<150xf32, #tpu.memory_space<smem>>
    %67 = vector.broadcast %66 : f32 to vector<8x128xf32>
    %68 = arith.mulf %67, %23 : vector<8x128xf32>
    %69 = arith.addf %65, %68 : vector<8x128xf32>
    %c11 = arith.constant 11 : index
    %70 = memref.load %arg1[%c11] : memref<150xf32, #tpu.memory_space<smem>>
    %71 = vector.broadcast %70 : f32 to vector<8x128xf32>
    %72 = arith.mulf %71, %18 : vector<8x128xf32>
    %73 = arith.addf %69, %72 : vector<8x128xf32>
    %c12 = arith.constant 12 : index
    %74 = memref.load %arg1[%c12] : memref<150xf32, #tpu.memory_space<smem>>
    %75 = vector.broadcast %74 : f32 to vector<8x128xf32>
    %76 = arith.mulf %75, %24 : vector<8x128xf32>
    %77 = arith.addf %73, %76 : vector<8x128xf32>
    %c13 = arith.constant 13 : index
    %78 = memref.load %arg1[%c13] : memref<150xf32, #tpu.memory_space<smem>>
    %79 = vector.broadcast %78 : f32 to vector<8x128xf32>
    %80 = arith.mulf %79, %22 : vector<8x128xf32>
    %81 = arith.addf %77, %80 : vector<8x128xf32>
    %cst_7 = arith.constant 0.000000e+00 : f32
    %82 = vector.broadcast %cst_7 : f32 to vector<8x128xf32>
    %83 = arith.maximumf %81, %82 : vector<8x128xf32>
    %c1_8 = arith.constant 1 : index
    %c0_9 = arith.constant 0 : index
    %c0_10 = arith.constant 0 : index
    %84 = vector.load %arg2[%c1_8, %c0_9, %c0_10] : memref<10x8x128xf32, #tpu.memory_space<vmem>>, vector<1x8x128xf32>
    %85 = vector.shape_cast %84 : vector<1x8x128xf32> to vector<8x128xf32>
    %86 = vector.shape_cast %83 : vector<8x128xf32> to vector<1x8x128xf32>
    tpu.vector_store %arg2[%c1_8, %c0_9, %c0_10], %86 {strides = array<i32>} : memref<10x8x128xf32, #tpu.memory_space<vmem>>, vector<1x8x128xf32>,
    %c14 = arith.constant 14 : index
    %87 = memref.load %arg1[%c14] : memref<150xf32, #tpu.memory_space<smem>>
    %88 = vector.broadcast %87 : f32 to vector<8x128xf32>
    %89 = arith.mulf %88, %6 : vector<8x128xf32>
    %c15 = arith.constant 15 : index
    %90 = memref.load %arg1[%c15] : memref<150xf32, #tpu.memory_space<smem>>
    %91 = vector.broadcast %90 : f32 to vector<8x128xf32>
    %92 = arith.mulf %91, %14 : vector<8x128xf32>
    %93 = arith.addf %89, %92 : vector<8x128xf32>
    %c16 = arith.constant 16 : index
    %94 = memref.load %arg1[%c16] : memref<150xf32, #tpu.memory_space<smem>>
    %95 = vector.broadcast %94 : f32 to vector<8x128xf32>
    %96 = arith.addf %93, %95 : vector<8x128xf32>
    %c17 = arith.constant 17 : index
    %97 = memref.load %arg1[%c17] : memref<150xf32, #tpu.memory_space<smem>>
    %98 = vector.broadcast %97 : f32 to vector<8x128xf32>
    %99 = arith.mulf %98, %23 : vector<8x128xf32>
    %100 = arith.addf %96, %99 : vector<8x128xf32>
    %c18 = arith.constant 18 : index
    %101 = memref.load %arg1[%c18] : memref<150xf32, #tpu.memory_space<smem>>
    %102 = vector.broadcast %101 : f32 to vector<8x128xf32>
    %103 = arith.mulf %102, %18 : vector<8x128xf32>
    %104 = arith.addf %100, %103 : vector<8x128xf32>
    %c19 = arith.constant 19 : index
    %105 = memref.load %arg1[%c19] : memref<150xf32, #tpu.memory_space<smem>>
    %106 = vector.broadcast %105 : f32 to vector<8x128xf32>
    %107 = arith.mulf %106, %24 : vector<8x128xf32>
    %108 = arith.addf %104, %107 : vector<8x128xf32>
    %c20 = arith.constant 20 : index
    %109 = memref.load %arg1[%c20] : memref<150xf32, #tpu.memory_space<smem>>
    %110 = vector.broadcast %109 : f32 to vector<8x128xf32>
    %111 = arith.mulf %110, %22 : vector<8x128xf32>
    %112 = arith.addf %108, %111 : vector<8x128xf32>
    %cst_11 = arith.constant 0.000000e+00 : f32
    %113 = vector.broadcast %cst_11 : f32 to vector<8x128xf32>
    %114 = arith.maximumf %112, %113 : vector<8x128xf32>
    %c2_12 = arith.constant 2 : index
    %c0_13 = arith.constant 0 : index
    %c0_14 = arith.constant 0 : index
    %115 = vector.load %arg2[%c2_12, %c0_13, %c0_14] : memref<10x8x128xf32, #tpu.memory_space<vmem>>, vector<1x8x128xf32>
    %116 = vector.shape_cast %115 : vector<1x8x128xf32> to vector<8x128xf32>
    %117 = vector.shape_cast %114 : vector<8x128xf32> to vector<1x8x128xf32>
    tpu.vector_store %arg2[%c2_12, %c0_13, %c0_14], %117 {strides = array<i32>} : memref<10x8x128xf32, #tpu.memory_space<vmem>>, vector<1x8x128xf32>,
    %c21 = arith.constant 21 : index
    %118 = memref.load %arg1[%c21] : memref<150xf32, #tpu.memory_space<smem>>
    %119 = vector.broadcast %118 : f32 to vector<8x128xf32>
    %120 = arith.mulf %119, %6 : vector<8x128xf32>
    %c22 = arith.constant 22 : index
    %121 = memref.load %arg1[%c22] : memref<150xf32, #tpu.memory_space<smem>>
    %122 = vector.broadcast %121 : f32 to vector<8x128xf32>
    %123 = arith.mulf %122, %14 : vector<8x128xf32>
    %124 = arith.addf %120, %123 : vector<8x128xf32>
    %c23 = arith.constant 23 : index
    %125 = memref.load %arg1[%c23] : memref<150xf32, #tpu.memory_space<smem>>
    %126 = vector.broadcast %125 : f32 to vector<8x128xf32>
    %127 = arith.addf %124, %126 : vector<8x128xf32>
    %c24 = arith.constant 24 : index
    %128 = memref.load %arg1[%c24] : memref<150xf32, #tpu.memory_space<smem>>
    %129 = vector.broadcast %128 : f32 to vector<8x128xf32>
    %130 = arith.mulf %129, %23 : vector<8x128xf32>
    %131 = arith.addf %127, %130 : vector<8x128xf32>
    %c25 = arith.constant 25 : index
    %132 = memref.load %arg1[%c25] : memref<150xf32, #tpu.memory_space<smem>>
    %133 = vector.broadcast %132 : f32 to vector<8x128xf32>
    %134 = arith.mulf %133, %18 : vector<8x128xf32>
    %135 = arith.addf %131, %134 : vector<8x128xf32>
    %c26 = arith.constant 26 : index
    %136 = memref.load %arg1[%c26] : memref<150xf32, #tpu.memory_space<smem>>
    %137 = vector.broadcast %136 : f32 to vector<8x128xf32>
    %138 = arith.mulf %137, %24 : vector<8x128xf32>
    %139 = arith.addf %135, %138 : vector<8x128xf32>
    %c27 = arith.constant 27 : index
    %140 = memref.load %arg1[%c27] : memref<150xf32, #tpu.memory_space<smem>>
    %141 = vector.broadcast %140 : f32 to vector<8x128xf32>
    %142 = arith.mulf %141, %22 : vector<8x128xf32>
    %143 = arith.addf %139, %142 : vector<8x128xf32>
    %cst_15 = arith.constant 0.000000e+00 : f32
    %144 = vector.broadcast %cst_15 : f32 to vector<8x128xf32>
    %145 = arith.maximumf %143, %144 : vector<8x128xf32>
    %c3_16 = arith.constant 3 : index
    %c0_17 = arith.constant 0 : index
    %c0_18 = arith.constant 0 : index
    %146 = vector.load %arg2[%c3_16, %c0_17, %c0_18] : memref<10x8x128xf32, #tpu.memory_space<vmem>>, vector<1x8x128xf32>
    %147 = vector.shape_cast %146 : vector<1x8x128xf32> to vector<8x128xf32>
    %148 = vector.shape_cast %145 : vector<8x128xf32> to vector<1x8x128xf32>
    tpu.vector_store %arg2[%c3_16, %c0_17, %c0_18], %148 {strides = array<i32>} : memref<10x8x128xf32, #tpu.memory_space<vmem>>, vector<1x8x128xf32>,
    %c28 = arith.constant 28 : index
    %149 = memref.load %arg1[%c28] : memref<150xf32, #tpu.memory_space<smem>>
    %150 = vector.broadcast %149 : f32 to vector<8x128xf32>
    %151 = arith.mulf %150, %6 : vector<8x128xf32>
    %c29 = arith.constant 29 : index
    %152 = memref.load %arg1[%c29] : memref<150xf32, #tpu.memory_space<smem>>
    %153 = vector.broadcast %152 : f32 to vector<8x128xf32>
    %154 = arith.mulf %153, %14 : vector<8x128xf32>
    %155 = arith.addf %151, %154 : vector<8x128xf32>
    %c30 = arith.constant 30 : index
    %156 = memref.load %arg1[%c30] : memref<150xf32, #tpu.memory_space<smem>>
    %157 = vector.broadcast %156 : f32 to vector<8x128xf32>
    %158 = arith.addf %155, %157 : vector<8x128xf32>
    %c31 = arith.constant 31 : index
    %159 = memref.load %arg1[%c31] : memref<150xf32, #tpu.memory_space<smem>>
    %160 = vector.broadcast %159 : f32 to vector<8x128xf32>
    %161 = arith.mulf %160, %23 : vector<8x128xf32>
    %162 = arith.addf %158, %161 : vector<8x128xf32>
    %c32 = arith.constant 32 : index
    %163 = memref.load %arg1[%c32] : memref<150xf32, #tpu.memory_space<smem>>
    %164 = vector.broadcast %163 : f32 to vector<8x128xf32>
    %165 = arith.mulf %164, %18 : vector<8x128xf32>
    %166 = arith.addf %162, %165 : vector<8x128xf32>
    %c33 = arith.constant 33 : index
    %167 = memref.load %arg1[%c33] : memref<150xf32, #tpu.memory_space<smem>>
    %168 = vector.broadcast %167 : f32 to vector<8x128xf32>
    %169 = arith.mulf %168, %24 : vector<8x128xf32>
    %170 = arith.addf %166, %169 : vector<8x128xf32>
    %c34 = arith.constant 34 : index
    %171 = memref.load %arg1[%c34] : memref<150xf32, #tpu.memory_space<smem>>
    %172 = vector.broadcast %171 : f32 to vector<8x128xf32>
    %173 = arith.mulf %172, %22 : vector<8x128xf32>
    %174 = arith.addf %170, %173 : vector<8x128xf32>
    %cst_19 = arith.constant 0.000000e+00 : f32
    %175 = vector.broadcast %cst_19 : f32 to vector<8x128xf32>
    %176 = arith.maximumf %174, %175 : vector<8x128xf32>
    %c4_20 = arith.constant 4 : index
    %c0_21 = arith.constant 0 : index
    %c0_22 = arith.constant 0 : index
    %177 = vector.load %arg2[%c4_20, %c0_21, %c0_22] : memref<10x8x128xf32, #tpu.memory_space<vmem>>, vector<1x8x128xf32>
    %178 = vector.shape_cast %177 : vector<1x8x128xf32> to vector<8x128xf32>
    %179 = vector.shape_cast %176 : vector<8x128xf32> to vector<1x8x128xf32>
    tpu.vector_store %arg2[%c4_20, %c0_21, %c0_22], %179 {strides = array<i32>} : memref<10x8x128xf32, #tpu.memory_space<vmem>>, vector<1x8x128xf32>,
    %c35 = arith.constant 35 : index
    %180 = memref.load %arg1[%c35] : memref<150xf32, #tpu.memory_space<smem>>
    %181 = vector.broadcast %180 : f32 to vector<8x128xf32>
    %182 = arith.mulf %181, %6 : vector<8x128xf32>
    %c36 = arith.constant 36 : index
    %183 = memref.load %arg1[%c36] : memref<150xf32, #tpu.memory_space<smem>>
    %184 = vector.broadcast %183 : f32 to vector<8x128xf32>
    %185 = arith.mulf %184, %14 : vector<8x128xf32>
    %186 = arith.addf %182, %185 : vector<8x128xf32>
    %c37 = arith.constant 37 : index
    %187 = memref.load %arg1[%c37] : memref<150xf32, #tpu.memory_space<smem>>
    %188 = vector.broadcast %187 : f32 to vector<8x128xf32>
    %189 = arith.addf %186, %188 : vector<8x128xf32>
    %c38 = arith.constant 38 : index
    %190 = memref.load %arg1[%c38] : memref<150xf32, #tpu.memory_space<smem>>
    %191 = vector.broadcast %190 : f32 to vector<8x128xf32>
    %192 = arith.mulf %191, %23 : vector<8x128xf32>
    %193 = arith.addf %189, %192 : vector<8x128xf32>
    %c39 = arith.constant 39 : index
    %194 = memref.load %arg1[%c39] : memref<150xf32, #tpu.memory_space<smem>>
    %195 = vector.broadcast %194 : f32 to vector<8x128xf32>
    %196 = arith.mulf %195, %18 : vector<8x128xf32>
    %197 = arith.addf %193, %196 : vector<8x128xf32>
    %c40 = arith.constant 40 : index
    %198 = memref.load %arg1[%c40] : memref<150xf32, #tpu.memory_space<smem>>
    %199 = vector.broadcast %198 : f32 to vector<8x128xf32>
    %200 = arith.mulf %199, %24 : vector<8x128xf32>
    %201 = arith.addf %197, %200 : vector<8x128xf32>
    %c41 = arith.constant 41 : index
    %202 = memref.load %arg1[%c41] : memref<150xf32, #tpu.memory_space<smem>>
    %203 = vector.broadcast %202 : f32 to vector<8x128xf32>
    %204 = arith.mulf %203, %22 : vector<8x128xf32>
    %205 = arith.addf %201, %204 : vector<8x128xf32>
    %cst_23 = arith.constant 0.000000e+00 : f32
    %206 = vector.broadcast %cst_23 : f32 to vector<8x128xf32>
    %207 = arith.maximumf %205, %206 : vector<8x128xf32>
    %c5_24 = arith.constant 5 : index
    %c0_25 = arith.constant 0 : index
    %c0_26 = arith.constant 0 : index
    %208 = vector.load %arg2[%c5_24, %c0_25, %c0_26] : memref<10x8x128xf32, #tpu.memory_space<vmem>>, vector<1x8x128xf32>
    %209 = vector.shape_cast %208 : vector<1x8x128xf32> to vector<8x128xf32>
    %210 = vector.shape_cast %207 : vector<8x128xf32> to vector<1x8x128xf32>
    tpu.vector_store %arg2[%c5_24, %c0_25, %c0_26], %210 {strides = array<i32>} : memref<10x8x128xf32, #tpu.memory_space<vmem>>, vector<1x8x128xf32>,
    %c42 = arith.constant 42 : index
    %211 = memref.load %arg1[%c42] : memref<150xf32, #tpu.memory_space<smem>>
    %212 = vector.broadcast %211 : f32 to vector<8x128xf32>
    %213 = arith.mulf %212, %6 : vector<8x128xf32>
    %c43 = arith.constant 43 : index
    %214 = memref.load %arg1[%c43] : memref<150xf32, #tpu.memory_space<smem>>
    %215 = vector.broadcast %214 : f32 to vector<8x128xf32>
    %216 = arith.mulf %215, %14 : vector<8x128xf32>
    %217 = arith.addf %213, %216 : vector<8x128xf32>
    %c44 = arith.constant 44 : index
    %218 = memref.load %arg1[%c44] : memref<150xf32, #tpu.memory_space<smem>>
    %219 = vector.broadcast %218 : f32 to vector<8x128xf32>
    %220 = arith.addf %217, %219 : vector<8x128xf32>
    %c45 = arith.constant 45 : index
    %221 = memref.load %arg1[%c45] : memref<150xf32, #tpu.memory_space<smem>>
    %222 = vector.broadcast %221 : f32 to vector<8x128xf32>
    %223 = arith.mulf %222, %23 : vector<8x128xf32>
    %224 = arith.addf %220, %223 : vector<8x128xf32>
    %c46 = arith.constant 46 : index
    %225 = memref.load %arg1[%c46] : memref<150xf32, #tpu.memory_space<smem>>
    %226 = vector.broadcast %225 : f32 to vector<8x128xf32>
    %227 = arith.mulf %226, %18 : vector<8x128xf32>
    %228 = arith.addf %224, %227 : vector<8x128xf32>
    %c47 = arith.constant 47 : index
    %229 = memref.load %arg1[%c47] : memref<150xf32, #tpu.memory_space<smem>>
    %230 = vector.broadcast %229 : f32 to vector<8x128xf32>
    %231 = arith.mulf %230, %24 : vector<8x128xf32>
    %232 = arith.addf %228, %231 : vector<8x128xf32>
    %c48 = arith.constant 48 : index
    %233 = memref.load %arg1[%c48] : memref<150xf32, #tpu.memory_space<smem>>
    %234 = vector.broadcast %233 : f32 to vector<8x128xf32>
    %235 = arith.mulf %234, %22 : vector<8x128xf32>
    %236 = arith.addf %232, %235 : vector<8x128xf32>
    %cst_27 = arith.constant 0.000000e+00 : f32
    %237 = vector.broadcast %cst_27 : f32 to vector<8x128xf32>
    %238 = arith.maximumf %236, %237 : vector<8x128xf32>
    %c6_28 = arith.constant 6 : index
    %c0_29 = arith.constant 0 : index
    %c0_30 = arith.constant 0 : index
    %239 = vector.load %arg2[%c6_28, %c0_29, %c0_30] : memref<10x8x128xf32, #tpu.memory_space<vmem>>, vector<1x8x128xf32>
    %240 = vector.shape_cast %239 : vector<1x8x128xf32> to vector<8x128xf32>
    %241 = vector.shape_cast %238 : vector<8x128xf32> to vector<1x8x128xf32>
    tpu.vector_store %arg2[%c6_28, %c0_29, %c0_30], %241 {strides = array<i32>} : memref<10x8x128xf32, #tpu.memory_space<vmem>>, vector<1x8x128xf32>,
    %c49 = arith.constant 49 : index
    %242 = memref.load %arg1[%c49] : memref<150xf32, #tpu.memory_space<smem>>
    %243 = vector.broadcast %242 : f32 to vector<8x128xf32>
    %244 = arith.mulf %243, %6 : vector<8x128xf32>
    %c50 = arith.constant 50 : index
    %245 = memref.load %arg1[%c50] : memref<150xf32, #tpu.memory_space<smem>>
    %246 = vector.broadcast %245 : f32 to vector<8x128xf32>
    %247 = arith.mulf %246, %14 : vector<8x128xf32>
    %248 = arith.addf %244, %247 : vector<8x128xf32>
    %c51 = arith.constant 51 : index
    %249 = memref.load %arg1[%c51] : memref<150xf32, #tpu.memory_space<smem>>
    %250 = vector.broadcast %249 : f32 to vector<8x128xf32>
    %251 = arith.addf %248, %250 : vector<8x128xf32>
    %c52 = arith.constant 52 : index
    %252 = memref.load %arg1[%c52] : memref<150xf32, #tpu.memory_space<smem>>
    %253 = vector.broadcast %252 : f32 to vector<8x128xf32>
    %254 = arith.mulf %253, %23 : vector<8x128xf32>
    %255 = arith.addf %251, %254 : vector<8x128xf32>
    %c53 = arith.constant 53 : index
    %256 = memref.load %arg1[%c53] : memref<150xf32, #tpu.memory_space<smem>>
    %257 = vector.broadcast %256 : f32 to vector<8x128xf32>
    %258 = arith.mulf %257, %18 : vector<8x128xf32>
    %259 = arith.addf %255, %258 : vector<8x128xf32>
    %c54 = arith.constant 54 : index
    %260 = memref.load %arg1[%c54] : memref<150xf32, #tpu.memory_space<smem>>
    %261 = vector.broadcast %260 : f32 to vector<8x128xf32>
    %262 = arith.mulf %261, %24 : vector<8x128xf32>
    %263 = arith.addf %259, %262 : vector<8x128xf32>
    %c55 = arith.constant 55 : index
    %264 = memref.load %arg1[%c55] : memref<150xf32, #tpu.memory_space<smem>>
    %265 = vector.broadcast %264 : f32 to vector<8x128xf32>
    %266 = arith.mulf %265, %22 : vector<8x128xf32>
    %267 = arith.addf %263, %266 : vector<8x128xf32>
    %cst_31 = arith.constant 0.000000e+00 : f32
    %268 = vector.broadcast %cst_31 : f32 to vector<8x128xf32>
    %269 = arith.maximumf %267, %268 : vector<8x128xf32>
    %c7_32 = arith.constant 7 : index
    %c0_33 = arith.constant 0 : index
    %c0_34 = arith.constant 0 : index
    %270 = vector.load %arg2[%c7_32, %c0_33, %c0_34] : memref<10x8x128xf32, #tpu.memory_space<vmem>>, vector<1x8x128xf32>
    %271 = vector.shape_cast %270 : vector<1x8x128xf32> to vector<8x128xf32>
    %272 = vector.shape_cast %269 : vector<8x128xf32> to vector<1x8x128xf32>
    tpu.vector_store %arg2[%c7_32, %c0_33, %c0_34], %272 {strides = array<i32>} : memref<10x8x128xf32, #tpu.memory_space<vmem>>, vector<1x8x128xf32>,
    %c56 = arith.constant 56 : index
    %273 = memref.load %arg1[%c56] : memref<150xf32, #tpu.memory_space<smem>>
    %274 = vector.broadcast %273 : f32 to vector<8x128xf32>
    %275 = arith.mulf %274, %6 : vector<8x128xf32>
    %c57 = arith.constant 57 : index
    %276 = memref.load %arg1[%c57] : memref<150xf32, #tpu.memory_space<smem>>
    %277 = vector.broadcast %276 : f32 to vector<8x128xf32>
    %278 = arith.mulf %277, %14 : vector<8x128xf32>
    %279 = arith.addf %275, %278 : vector<8x128xf32>
    %c58 = arith.constant 58 : index
    %280 = memref.load %arg1[%c58] : memref<150xf32, #tpu.memory_space<smem>>
    %281 = vector.broadcast %280 : f32 to vector<8x128xf32>
    %282 = arith.addf %279, %281 : vector<8x128xf32>
    %c59 = arith.constant 59 : index
    %283 = memref.load %arg1[%c59] : memref<150xf32, #tpu.memory_space<smem>>
    %284 = vector.broadcast %283 : f32 to vector<8x128xf32>
    %285 = arith.mulf %284, %23 : vector<8x128xf32>
    %286 = arith.addf %282, %285 : vector<8x128xf32>
    %c60 = arith.constant 60 : index
    %287 = memref.load %arg1[%c60] : memref<150xf32, #tpu.memory_space<smem>>
    %288 = vector.broadcast %287 : f32 to vector<8x128xf32>
    %289 = arith.mulf %288, %18 : vector<8x128xf32>
    %290 = arith.addf %286, %289 : vector<8x128xf32>
    %c61 = arith.constant 61 : index
    %291 = memref.load %arg1[%c61] : memref<150xf32, #tpu.memory_space<smem>>
    %292 = vector.broadcast %291 : f32 to vector<8x128xf32>
    %293 = arith.mulf %292, %24 : vector<8x128xf32>
    %294 = arith.addf %290, %293 : vector<8x128xf32>
    %c62 = arith.constant 62 : index
    %295 = memref.load %arg1[%c62] : memref<150xf32, #tpu.memory_space<smem>>
    %296 = vector.broadcast %295 : f32 to vector<8x128xf32>
    %297 = arith.mulf %296, %22 : vector<8x128xf32>
    %298 = arith.addf %294, %297 : vector<8x128xf32>
    %cst_35 = arith.constant 0.000000e+00 : f32
    %299 = vector.broadcast %cst_35 : f32 to vector<8x128xf32>
    %300 = arith.maximumf %298, %299 : vector<8x128xf32>
    %c8_36 = arith.constant 8 : index
    %c0_37 = arith.constant 0 : index
    %c0_38 = arith.constant 0 : index
    %301 = vector.load %arg2[%c8_36, %c0_37, %c0_38] : memref<10x8x128xf32, #tpu.memory_space<vmem>>, vector<1x8x128xf32>
    %302 = vector.shape_cast %301 : vector<1x8x128xf32> to vector<8x128xf32>
    %303 = vector.shape_cast %300 : vector<8x128xf32> to vector<1x8x128xf32>
    tpu.vector_store %arg2[%c8_36, %c0_37, %c0_38], %303 {strides = array<i32>} : memref<10x8x128xf32, #tpu.memory_space<vmem>>, vector<1x8x128xf32>,
    %c63 = arith.constant 63 : index
    %304 = memref.load %arg1[%c63] : memref<150xf32, #tpu.memory_space<smem>>
    %305 = vector.broadcast %304 : f32 to vector<8x128xf32>
    %306 = arith.mulf %305, %6 : vector<8x128xf32>
    %c64 = arith.constant 64 : index
    %307 = memref.load %arg1[%c64] : memref<150xf32, #tpu.memory_space<smem>>
    %308 = vector.broadcast %307 : f32 to vector<8x128xf32>
    %309 = arith.mulf %308, %14 : vector<8x128xf32>
    %310 = arith.addf %306, %309 : vector<8x128xf32>
    %c65 = arith.constant 65 : index
    %311 = memref.load %arg1[%c65] : memref<150xf32, #tpu.memory_space<smem>>
    %312 = vector.broadcast %311 : f32 to vector<8x128xf32>
    %313 = arith.addf %310, %312 : vector<8x128xf32>
    %c66 = arith.constant 66 : index
    %314 = memref.load %arg1[%c66] : memref<150xf32, #tpu.memory_space<smem>>
    %315 = vector.broadcast %314 : f32 to vector<8x128xf32>
    %316 = arith.mulf %315, %23 : vector<8x128xf32>
    %317 = arith.addf %313, %316 : vector<8x128xf32>
    %c67 = arith.constant 67 : index
    %318 = memref.load %arg1[%c67] : memref<150xf32, #tpu.memory_space<smem>>
    %319 = vector.broadcast %318 : f32 to vector<8x128xf32>
    %320 = arith.mulf %319, %18 : vector<8x128xf32>
    %321 = arith.addf %317, %320 : vector<8x128xf32>
    %c68 = arith.constant 68 : index
    %322 = memref.load %arg1[%c68] : memref<150xf32, #tpu.memory_space<smem>>
    %323 = vector.broadcast %322 : f32 to vector<8x128xf32>
    %324 = arith.mulf %323, %24 : vector<8x128xf32>
    %325 = arith.addf %321, %324 : vector<8x128xf32>
    %c69 = arith.constant 69 : index
    %326 = memref.load %arg1[%c69] : memref<150xf32, #tpu.memory_space<smem>>
    %327 = vector.broadcast %326 : f32 to vector<8x128xf32>
    %328 = arith.mulf %327, %22 : vector<8x128xf32>
    %329 = arith.addf %325, %328 : vector<8x128xf32>
    %cst_39 = arith.constant 0.000000e+00 : f32
    %330 = vector.broadcast %cst_39 : f32 to vector<8x128xf32>
    %331 = arith.maximumf %329, %330 : vector<8x128xf32>
    %c9_40 = arith.constant 9 : index
    %c0_41 = arith.constant 0 : index
    %c0_42 = arith.constant 0 : index
    %332 = vector.load %arg2[%c9_40, %c0_41, %c0_42] : memref<10x8x128xf32, #tpu.memory_space<vmem>>, vector<1x8x128xf32>
    %333 = vector.shape_cast %332 : vector<1x8x128xf32> to vector<8x128xf32>
    %334 = vector.shape_cast %331 : vector<8x128xf32> to vector<1x8x128xf32>
    tpu.vector_store %arg2[%c9_40, %c0_41, %c0_42], %334 {strides = array<i32>} : memref<10x8x128xf32, #tpu.memory_space<vmem>>, vector<1x8x128xf32>,
    %335 = vector.extract_strided_slice %6 {offsets = [0, 0], sizes = [1, 128], strides = [1, 1]} : vector<8x128xf32> to vector<1x128xf32>
    %336 = vector.extract_strided_slice %18 {offsets = [0, 0], sizes = [1, 128], strides = [1, 1]} : vector<8x128xf32> to vector<1x128xf32>
    %337 = vector.extract_strided_slice %22 {offsets = [0, 0], sizes = [1, 128], strides = [1, 1]} : vector<8x128xf32> to vector<1x128xf32>
    %c0_i32_43 = arith.constant 0 : i32
    %338 = arith.cmpi eq, %arg0, %c0_i32_43 : i32
    %339 = arith.extui %338 : i1 to i32
    %c0_i32_44 = arith.constant 0 : i32
    %340 = arith.cmpi ne, %339, %c0_i32_44 : i32
    scf.if %340 {
      %c70 = arith.constant 70 : index
      %344 = memref.load %arg1[%c70] : memref<150xf32, #tpu.memory_space<smem>>
      %345 = vector.broadcast %344 : f32 to vector<1x128xf32>
      %346 = arith.mulf %345, %335 : vector<1x128xf32>
      %c71 = arith.constant 71 : index
      %347 = memref.load %arg1[%c71] : memref<150xf32, #tpu.memory_space<smem>>
      %348 = vector.broadcast %347 : f32 to vector<1x128xf32>
      %349 = arith.addf %346, %348 : vector<1x128xf32>
      %c72 = arith.constant 72 : index
      %350 = memref.load %arg1[%c72] : memref<150xf32, #tpu.memory_space<smem>>
      %351 = vector.broadcast %350 : f32 to vector<1x128xf32>
      %352 = arith.mulf %351, %336 : vector<1x128xf32>
      %353 = arith.addf %349, %352 : vector<1x128xf32>
      %c73 = arith.constant 73 : index
      %354 = memref.load %arg1[%c73] : memref<150xf32, #tpu.memory_space<smem>>
      %355 = vector.broadcast %354 : f32 to vector<1x128xf32>
      %356 = arith.mulf %355, %337 : vector<1x128xf32>
      %357 = arith.addf %353, %356 : vector<1x128xf32>
      %cst_46 = arith.constant 0.000000e+00 : f32
      %358 = vector.broadcast %cst_46 : f32 to vector<1x128xf32>
      %359 = arith.maximumf %357, %358 : vector<1x128xf32>
      %c0_47 = arith.constant 0 : index
      %c0_48 = arith.constant 0 : index
      %c0_49 = arith.constant 0 : index
      %360 = vector.load %arg2[%c0_47, %c0_48, %c0_49] : memref<10x8x128xf32, #tpu.memory_space<vmem>>, vector<1x1x128xf32>
      %361 = vector.shape_cast %360 : vector<1x1x128xf32> to vector<1x128xf32>
      %362 = vector.shape_cast %359 : vector<1x128xf32> to vector<1x1x128xf32>
      tpu.vector_store %arg2[%c0_47, %c0_48, %c0_49], %362 {strides = array<i32>} : memref<10x8x128xf32, #tpu.memory_space<vmem>>, vector<1x1x128xf32>,
      %c74 = arith.constant 74 : index
      %363 = memref.load %arg1[%c74] : memref<150xf32, #tpu.memory_space<smem>>
      %364 = vector.broadcast %363 : f32 to vector<1x128xf32>
      %365 = arith.mulf %364, %335 : vector<1x128xf32>
      %c75 = arith.constant 75 : index
      %366 = memref.load %arg1[%c75] : memref<150xf32, #tpu.memory_space<smem>>
      %367 = vector.broadcast %366 : f32 to vector<1x128xf32>
      %368 = arith.addf %365, %367 : vector<1x128xf32>
      %c76 = arith.constant 76 : index
      %369 = memref.load %arg1[%c76] : memref<150xf32, #tpu.memory_space<smem>>
      %370 = vector.broadcast %369 : f32 to vector<1x128xf32>
      %371 = arith.mulf %370, %336 : vector<1x128xf32>
      %372 = arith.addf %368, %371 : vector<1x128xf32>
      %c77 = arith.constant 77 : index
      %373 = memref.load %arg1[%c77] : memref<150xf32, #tpu.memory_space<smem>>
      %374 = vector.broadcast %373 : f32 to vector<1x128xf32>
      %375 = arith.mulf %374, %337 : vector<1x128xf32>
      %376 = arith.addf %372, %375 : vector<1x128xf32>
      %cst_50 = arith.constant 0.000000e+00 : f32
      %377 = vector.broadcast %cst_50 : f32 to vector<1x128xf32>
      %378 = arith.maximumf %376, %377 : vector<1x128xf32>
      %c1_51 = arith.constant 1 : index
      %c0_52 = arith.constant 0 : index
      %c0_53 = arith.constant 0 : index
      %379 = vector.load %arg2[%c1_51, %c0_52, %c0_53] : memref<10x8x128xf32, #tpu.memory_space<vmem>>, vector<1x1x128xf32>
      %380 = vector.shape_cast %379 : vector<1x1x128xf32> to vector<1x128xf32>
      %381 = vector.shape_cast %378 : vector<1x128xf32> to vector<1x1x128xf32>
      tpu.vector_store %arg2[%c1_51, %c0_52, %c0_53], %381 {strides = array<i32>} : memref<10x8x128xf32, #tpu.memory_space<vmem>>, vector<1x1x128xf32>,
      %c78 = arith.constant 78 : index
      %382 = memref.load %arg1[%c78] : memref<150xf32, #tpu.memory_space<smem>>
      %383 = vector.broadcast %382 : f32 to vector<1x128xf32>
      %384 = arith.mulf %383, %335 : vector<1x128xf32>
      %c79 = arith.constant 79 : index
      %385 = memref.load %arg1[%c79] : memref<150xf32, #tpu.memory_space<smem>>
      %386 = vector.broadcast %385 : f32 to vector<1x128xf32>
      %387 = arith.addf %384, %386 : vector<1x128xf32>
      %c80 = arith.constant 80 : index
      %388 = memref.load %arg1[%c80] : memref<150xf32, #tpu.memory_space<smem>>
      %389 = vector.broadcast %388 : f32 to vector<1x128xf32>
      %390 = arith.mulf %389, %336 : vector<1x128xf32>
      %391 = arith.addf %387, %390 : vector<1x128xf32>
      %c81 = arith.constant 81 : index
      %392 = memref.load %arg1[%c81] : memref<150xf32, #tpu.memory_space<smem>>
      %393 = vector.broadcast %392 : f32 to vector<1x128xf32>
      %394 = arith.mulf %393, %337 : vector<1x128xf32>
      %395 = arith.addf %391, %394 : vector<1x128xf32>
      %cst_54 = arith.constant 0.000000e+00 : f32
      %396 = vector.broadcast %cst_54 : f32 to vector<1x128xf32>
      %397 = arith.maximumf %395, %396 : vector<1x128xf32>
      %c2_55 = arith.constant 2 : index
      %c0_56 = arith.constant 0 : index
      %c0_57 = arith.constant 0 : index
      %398 = vector.load %arg2[%c2_55, %c0_56, %c0_57] : memref<10x8x128xf32, #tpu.memory_space<vmem>>, vector<1x1x128xf32>
      %399 = vector.shape_cast %398 : vector<1x1x128xf32> to vector<1x128xf32>
      %400 = vector.shape_cast %397 : vector<1x128xf32> to vector<1x1x128xf32>
      tpu.vector_store %arg2[%c2_55, %c0_56, %c0_57], %400 {strides = array<i32>} : memref<10x8x128xf32, #tpu.memory_space<vmem>>, vector<1x1x128xf32>,
      %c82 = arith.constant 82 : index
      %401 = memref.load %arg1[%c82] : memref<150xf32, #tpu.memory_space<smem>>
      %402 = vector.broadcast %401 : f32 to vector<1x128xf32>
      %403 = arith.mulf %402, %335 : vector<1x128xf32>
      %c83 = arith.constant 83 : index
      %404 = memref.load %arg1[%c83] : memref<150xf32, #tpu.memory_space<smem>>
      %405 = vector.broadcast %404 : f32 to vector<1x128xf32>
      %406 = arith.addf %403, %405 : vector<1x128xf32>
      %c84 = arith.constant 84 : index
      %407 = memref.load %arg1[%c84] : memref<150xf32, #tpu.memory_space<smem>>
      %408 = vector.broadcast %407 : f32 to vector<1x128xf32>
      %409 = arith.mulf %408, %336 : vector<1x128xf32>
      %410 = arith.addf %406, %409 : vector<1x128xf32>
      %c85 = arith.constant 85 : index
      %411 = memref.load %arg1[%c85] : memref<150xf32, #tpu.memory_space<smem>>
      %412 = vector.broadcast %411 : f32 to vector<1x128xf32>
      %413 = arith.mulf %412, %337 : vector<1x128xf32>
      %414 = arith.addf %410, %413 : vector<1x128xf32>
      %cst_58 = arith.constant 0.000000e+00 : f32
      %415 = vector.broadcast %cst_58 : f32 to vector<1x128xf32>
      %416 = arith.maximumf %414, %415 : vector<1x128xf32>
      %c3_59 = arith.constant 3 : index
      %c0_60 = arith.constant 0 : index
      %c0_61 = arith.constant 0 : index
      %417 = vector.load %arg2[%c3_59, %c0_60, %c0_61] : memref<10x8x128xf32, #tpu.memory_space<vmem>>, vector<1x1x128xf32>
      %418 = vector.shape_cast %417 : vector<1x1x128xf32> to vector<1x128xf32>
      %419 = vector.shape_cast %416 : vector<1x128xf32> to vector<1x1x128xf32>
      tpu.vector_store %arg2[%c3_59, %c0_60, %c0_61], %419 {strides = array<i32>} : memref<10x8x128xf32, #tpu.memory_space<vmem>>, vector<1x1x128xf32>,
      %c86 = arith.constant 86 : index
      %420 = memref.load %arg1[%c86] : memref<150xf32, #tpu.memory_space<smem>>
      %421 = vector.broadcast %420 : f32 to vector<1x128xf32>
      %422 = arith.mulf %421, %335 : vector<1x128xf32>
      %c87 = arith.constant 87 : index
      %423 = memref.load %arg1[%c87] : memref<150xf32, #tpu.memory_space<smem>>
      %424 = vector.broadcast %423 : f32 to vector<1x128xf32>
      %425 = arith.addf %422, %424 : vector<1x128xf32>
      %c88 = arith.constant 88 : index
      %426 = memref.load %arg1[%c88] : memref<150xf32, #tpu.memory_space<smem>>
      %427 = vector.broadcast %426 : f32 to vector<1x128xf32>
      %428 = arith.mulf %427, %336 : vector<1x128xf32>
      %429 = arith.addf %425, %428 : vector<1x128xf32>
      %c89 = arith.constant 89 : index
      %430 = memref.load %arg1[%c89] : memref<150xf32, #tpu.memory_space<smem>>
      %431 = vector.broadcast %430 : f32 to vector<1x128xf32>
      %432 = arith.mulf %431, %337 : vector<1x128xf32>
      %433 = arith.addf %429, %432 : vector<1x128xf32>
      %cst_62 = arith.constant 0.000000e+00 : f32
      %434 = vector.broadcast %cst_62 : f32 to vector<1x128xf32>
      %435 = arith.maximumf %433, %434 : vector<1x128xf32>
      %c4_63 = arith.constant 4 : index
      %c0_64 = arith.constant 0 : index
      %c0_65 = arith.constant 0 : index
      %436 = vector.load %arg2[%c4_63, %c0_64, %c0_65] : memref<10x8x128xf32, #tpu.memory_space<vmem>>, vector<1x1x128xf32>
      %437 = vector.shape_cast %436 : vector<1x1x128xf32> to vector<1x128xf32>
      %438 = vector.shape_cast %435 : vector<1x128xf32> to vector<1x1x128xf32>
      tpu.vector_store %arg2[%c4_63, %c0_64, %c0_65], %438 {strides = array<i32>} : memref<10x8x128xf32, #tpu.memory_space<vmem>>, vector<1x1x128xf32>,
      %c90 = arith.constant 90 : index
      %439 = memref.load %arg1[%c90] : memref<150xf32, #tpu.memory_space<smem>>
      %440 = vector.broadcast %439 : f32 to vector<1x128xf32>
      %441 = arith.mulf %440, %335 : vector<1x128xf32>
      %c91 = arith.constant 91 : index
      %442 = memref.load %arg1[%c91] : memref<150xf32, #tpu.memory_space<smem>>
      %443 = vector.broadcast %442 : f32 to vector<1x128xf32>
      %444 = arith.addf %441, %443 : vector<1x128xf32>
      %c92 = arith.constant 92 : index
      %445 = memref.load %arg1[%c92] : memref<150xf32, #tpu.memory_space<smem>>
      %446 = vector.broadcast %445 : f32 to vector<1x128xf32>
      %447 = arith.mulf %446, %336 : vector<1x128xf32>
      %448 = arith.addf %444, %447 : vector<1x128xf32>
      %c93 = arith.constant 93 : index
      %449 = memref.load %arg1[%c93] : memref<150xf32, #tpu.memory_space<smem>>
      %450 = vector.broadcast %449 : f32 to vector<1x128xf32>
      %451 = arith.mulf %450, %337 : vector<1x128xf32>
      %452 = arith.addf %448, %451 : vector<1x128xf32>
      %cst_66 = arith.constant 0.000000e+00 : f32
      %453 = vector.broadcast %cst_66 : f32 to vector<1x128xf32>
      %454 = arith.maximumf %452, %453 : vector<1x128xf32>
      %c5_67 = arith.constant 5 : index
      %c0_68 = arith.constant 0 : index
      %c0_69 = arith.constant 0 : index
      %455 = vector.load %arg2[%c5_67, %c0_68, %c0_69] : memref<10x8x128xf32, #tpu.memory_space<vmem>>, vector<1x1x128xf32>
      %456 = vector.shape_cast %455 : vector<1x1x128xf32> to vector<1x128xf32>
      %457 = vector.shape_cast %454 : vector<1x128xf32> to vector<1x1x128xf32>
      tpu.vector_store %arg2[%c5_67, %c0_68, %c0_69], %457 {strides = array<i32>} : memref<10x8x128xf32, #tpu.memory_space<vmem>>, vector<1x1x128xf32>,
      %c94 = arith.constant 94 : index
      %458 = memref.load %arg1[%c94] : memref<150xf32, #tpu.memory_space<smem>>
      %459 = vector.broadcast %458 : f32 to vector<1x128xf32>
      %460 = arith.mulf %459, %335 : vector<1x128xf32>
      %c95 = arith.constant 95 : index
      %461 = memref.load %arg1[%c95] : memref<150xf32, #tpu.memory_space<smem>>
      %462 = vector.broadcast %461 : f32 to vector<1x128xf32>
      %463 = arith.addf %460, %462 : vector<1x128xf32>
      %c96 = arith.constant 96 : index
      %464 = memref.load %arg1[%c96] : memref<150xf32, #tpu.memory_space<smem>>
      %465 = vector.broadcast %464 : f32 to vector<1x128xf32>
      %466 = arith.mulf %465, %336 : vector<1x128xf32>
      %467 = arith.addf %463, %466 : vector<1x128xf32>
      %c97 = arith.constant 97 : index
      %468 = memref.load %arg1[%c97] : memref<150xf32, #tpu.memory_space<smem>>
      %469 = vector.broadcast %468 : f32 to vector<1x128xf32>
      %470 = arith.mulf %469, %337 : vector<1x128xf32>
      %471 = arith.addf %467, %470 : vector<1x128xf32>
      %cst_70 = arith.constant 0.000000e+00 : f32
      %472 = vector.broadcast %cst_70 : f32 to vector<1x128xf32>
      %473 = arith.maximumf %471, %472 : vector<1x128xf32>
      %c6_71 = arith.constant 6 : index
      %c0_72 = arith.constant 0 : index
      %c0_73 = arith.constant 0 : index
      %474 = vector.load %arg2[%c6_71, %c0_72, %c0_73] : memref<10x8x128xf32, #tpu.memory_space<vmem>>, vector<1x1x128xf32>
      %475 = vector.shape_cast %474 : vector<1x1x128xf32> to vector<1x128xf32>
      %476 = vector.shape_cast %473 : vector<1x128xf32> to vector<1x1x128xf32>
      tpu.vector_store %arg2[%c6_71, %c0_72, %c0_73], %476 {strides = array<i32>} : memref<10x8x128xf32, #tpu.memory_space<vmem>>, vector<1x1x128xf32>,
      %c98 = arith.constant 98 : index
      %477 = memref.load %arg1[%c98] : memref<150xf32, #tpu.memory_space<smem>>
      %478 = vector.broadcast %477 : f32 to vector<1x128xf32>
      %479 = arith.mulf %478, %335 : vector<1x128xf32>
      %c99 = arith.constant 99 : index
      %480 = memref.load %arg1[%c99] : memref<150xf32, #tpu.memory_space<smem>>
      %481 = vector.broadcast %480 : f32 to vector<1x128xf32>
      %482 = arith.addf %479, %481 : vector<1x128xf32>
      %c100 = arith.constant 100 : index
      %483 = memref.load %arg1[%c100] : memref<150xf32, #tpu.memory_space<smem>>
      %484 = vector.broadcast %483 : f32 to vector<1x128xf32>
      %485 = arith.mulf %484, %336 : vector<1x128xf32>
      %486 = arith.addf %482, %485 : vector<1x128xf32>
      %c101 = arith.constant 101 : index
      %487 = memref.load %arg1[%c101] : memref<150xf32, #tpu.memory_space<smem>>
      %488 = vector.broadcast %487 : f32 to vector<1x128xf32>
      %489 = arith.mulf %488, %337 : vector<1x128xf32>
      %490 = arith.addf %486, %489 : vector<1x128xf32>
      %cst_74 = arith.constant 0.000000e+00 : f32
      %491 = vector.broadcast %cst_74 : f32 to vector<1x128xf32>
      %492 = arith.maximumf %490, %491 : vector<1x128xf32>
      %c7_75 = arith.constant 7 : index
      %c0_76 = arith.constant 0 : index
      %c0_77 = arith.constant 0 : index
      %493 = vector.load %arg2[%c7_75, %c0_76, %c0_77] : memref<10x8x128xf32, #tpu.memory_space<vmem>>, vector<1x1x128xf32>
      %494 = vector.shape_cast %493 : vector<1x1x128xf32> to vector<1x128xf32>
      %495 = vector.shape_cast %492 : vector<1x128xf32> to vector<1x1x128xf32>
      tpu.vector_store %arg2[%c7_75, %c0_76, %c0_77], %495 {strides = array<i32>} : memref<10x8x128xf32, #tpu.memory_space<vmem>>, vector<1x1x128xf32>,
      %c102 = arith.constant 102 : index
      %496 = memref.load %arg1[%c102] : memref<150xf32, #tpu.memory_space<smem>>
      %497 = vector.broadcast %496 : f32 to vector<1x128xf32>
      %498 = arith.mulf %497, %335 : vector<1x128xf32>
      %c103 = arith.constant 103 : index
      %499 = memref.load %arg1[%c103] : memref<150xf32, #tpu.memory_space<smem>>
      %500 = vector.broadcast %499 : f32 to vector<1x128xf32>
      %501 = arith.addf %498, %500 : vector<1x128xf32>
      %c104 = arith.constant 104 : index
      %502 = memref.load %arg1[%c104] : memref<150xf32, #tpu.memory_space<smem>>
      %503 = vector.broadcast %502 : f32 to vector<1x128xf32>
      %504 = arith.mulf %503, %336 : vector<1x128xf32>
      %505 = arith.addf %501, %504 : vector<1x128xf32>
      %c105 = arith.constant 105 : index
      %506 = memref.load %arg1[%c105] : memref<150xf32, #tpu.memory_space<smem>>
      %507 = vector.broadcast %506 : f32 to vector<1x128xf32>
      %508 = arith.mulf %507, %337 : vector<1x128xf32>
      %509 = arith.addf %505, %508 : vector<1x128xf32>
      %cst_78 = arith.constant 0.000000e+00 : f32
      %510 = vector.broadcast %cst_78 : f32 to vector<1x128xf32>
      %511 = arith.maximumf %509, %510 : vector<1x128xf32>
      %c8_79 = arith.constant 8 : index
      %c0_80 = arith.constant 0 : index
      %c0_81 = arith.constant 0 : index
      %512 = vector.load %arg2[%c8_79, %c0_80, %c0_81] : memref<10x8x128xf32, #tpu.memory_space<vmem>>, vector<1x1x128xf32>
      %513 = vector.shape_cast %512 : vector<1x1x128xf32> to vector<1x128xf32>
      %514 = vector.shape_cast %511 : vector<1x128xf32> to vector<1x1x128xf32>
      tpu.vector_store %arg2[%c8_79, %c0_80, %c0_81], %514 {strides = array<i32>} : memref<10x8x128xf32, #tpu.memory_space<vmem>>, vector<1x1x128xf32>,
      %c106 = arith.constant 106 : index
      %515 = memref.load %arg1[%c106] : memref<150xf32, #tpu.memory_space<smem>>
      %516 = vector.broadcast %515 : f32 to vector<1x128xf32>
      %517 = arith.mulf %516, %335 : vector<1x128xf32>
      %c107 = arith.constant 107 : index
      %518 = memref.load %arg1[%c107] : memref<150xf32, #tpu.memory_space<smem>>
      %519 = vector.broadcast %518 : f32 to vector<1x128xf32>
      %520 = arith.addf %517, %519 : vector<1x128xf32>
      %c108 = arith.constant 108 : index
      %521 = memref.load %arg1[%c108] : memref<150xf32, #tpu.memory_space<smem>>
      %522 = vector.broadcast %521 : f32 to vector<1x128xf32>
      %523 = arith.mulf %522, %336 : vector<1x128xf32>
      %524 = arith.addf %520, %523 : vector<1x128xf32>
      %c109 = arith.constant 109 : index
      %525 = memref.load %arg1[%c109] : memref<150xf32, #tpu.memory_space<smem>>
      %526 = vector.broadcast %525 : f32 to vector<1x128xf32>
      %527 = arith.mulf %526, %337 : vector<1x128xf32>
      %528 = arith.addf %524, %527 : vector<1x128xf32>
      %cst_82 = arith.constant 0.000000e+00 : f32
      %529 = vector.broadcast %cst_82 : f32 to vector<1x128xf32>
      %530 = arith.maximumf %528, %529 : vector<1x128xf32>
      %c9_83 = arith.constant 9 : index
      %c0_84 = arith.constant 0 : index
      %c0_85 = arith.constant 0 : index
      %531 = vector.load %arg2[%c9_83, %c0_84, %c0_85] : memref<10x8x128xf32, #tpu.memory_space<vmem>>, vector<1x1x128xf32>
      %532 = vector.shape_cast %531 : vector<1x1x128xf32> to vector<1x128xf32>
      %533 = vector.shape_cast %530 : vector<1x128xf32> to vector<1x1x128xf32>
      tpu.vector_store %arg2[%c9_83, %c0_84, %c0_85], %533 {strides = array<i32>} : memref<10x8x128xf32, #tpu.memory_space<vmem>>, vector<1x1x128xf32>,
    } else {
    }
    %c1_i32 = arith.constant 1 : i32
    %341 = arith.cmpi eq, %arg0, %c1_i32 : i32
    %342 = arith.extui %341 : i1 to i32
    %c0_i32_45 = arith.constant 0 : i32
    %343 = arith.cmpi ne, %342, %c0_i32_45 : i32
    scf.if %343 {
      %c110 = arith.constant 110 : index
      %344 = memref.load %arg1[%c110] : memref<150xf32, #tpu.memory_space<smem>>
      %345 = vector.broadcast %344 : f32 to vector<1x128xf32>
      %346 = arith.mulf %345, %335 : vector<1x128xf32>
      %c111 = arith.constant 111 : index
      %347 = memref.load %arg1[%c111] : memref<150xf32, #tpu.memory_space<smem>>
      %348 = vector.broadcast %347 : f32 to vector<1x128xf32>
      %349 = arith.addf %346, %348 : vector<1x128xf32>
      %c112 = arith.constant 112 : index
      %350 = memref.load %arg1[%c112] : memref<150xf32, #tpu.memory_space<smem>>
      %351 = vector.broadcast %350 : f32 to vector<1x128xf32>
      %352 = arith.mulf %351, %336 : vector<1x128xf32>
      %353 = arith.addf %349, %352 : vector<1x128xf32>
      %c113 = arith.constant 113 : index
      %354 = memref.load %arg1[%c113] : memref<150xf32, #tpu.memory_space<smem>>
      %355 = vector.broadcast %354 : f32 to vector<1x128xf32>
      %356 = arith.mulf %355, %337 : vector<1x128xf32>
      %357 = arith.addf %353, %356 : vector<1x128xf32>
      %cst_46 = arith.constant 0.000000e+00 : f32
      %358 = vector.broadcast %cst_46 : f32 to vector<1x128xf32>
      %359 = arith.maximumf %357, %358 : vector<1x128xf32>
      %c0_47 = arith.constant 0 : index
      %c7_48 = arith.constant 7 : index
      %c0_49 = arith.constant 0 : index
      %360 = vector.load %arg2[%c0_47, %c7_48, %c0_49] : memref<10x8x128xf32, #tpu.memory_space<vmem>>, vector<1x1x128xf32>
      %361 = vector.shape_cast %360 : vector<1x1x128xf32> to vector<1x128xf32>
      %362 = vector.shape_cast %359 : vector<1x128xf32> to vector<1x1x128xf32>
      tpu.vector_store %arg2[%c0_47, %c7_48, %c0_49], %362 {strides = array<i32>} : memref<10x8x128xf32, #tpu.memory_space<vmem>>, vector<1x1x128xf32>,
      %c114 = arith.constant 114 : index
      %363 = memref.load %arg1[%c114] : memref<150xf32, #tpu.memory_space<smem>>
      %364 = vector.broadcast %363 : f32 to vector<1x128xf32>
      %365 = arith.mulf %364, %335 : vector<1x128xf32>
      %c115 = arith.constant 115 : index
      %366 = memref.load %arg1[%c115] : memref<150xf32, #tpu.memory_space<smem>>
      %367 = vector.broadcast %366 : f32 to vector<1x128xf32>
      %368 = arith.addf %365, %367 : vector<1x128xf32>
      %c116 = arith.constant 116 : index
      %369 = memref.load %arg1[%c116] : memref<150xf32, #tpu.memory_space<smem>>
      %370 = vector.broadcast %369 : f32 to vector<1x128xf32>
      %371 = arith.mulf %370, %336 : vector<1x128xf32>
      %372 = arith.addf %368, %371 : vector<1x128xf32>
      %c117 = arith.constant 117 : index
      %373 = memref.load %arg1[%c117] : memref<150xf32, #tpu.memory_space<smem>>
      %374 = vector.broadcast %373 : f32 to vector<1x128xf32>
      %375 = arith.mulf %374, %337 : vector<1x128xf32>
      %376 = arith.addf %372, %375 : vector<1x128xf32>
      %cst_50 = arith.constant 0.000000e+00 : f32
      %377 = vector.broadcast %cst_50 : f32 to vector<1x128xf32>
      %378 = arith.maximumf %376, %377 : vector<1x128xf32>
      %c1_51 = arith.constant 1 : index
      %c7_52 = arith.constant 7 : index
      %c0_53 = arith.constant 0 : index
      %379 = vector.load %arg2[%c1_51, %c7_52, %c0_53] : memref<10x8x128xf32, #tpu.memory_space<vmem>>, vector<1x1x128xf32>
      %380 = vector.shape_cast %379 : vector<1x1x128xf32> to vector<1x128xf32>
      %381 = vector.shape_cast %378 : vector<1x128xf32> to vector<1x1x128xf32>
      tpu.vector_store %arg2[%c1_51, %c7_52, %c0_53], %381 {strides = array<i32>} : memref<10x8x128xf32, #tpu.memory_space<vmem>>, vector<1x1x128xf32>,
      %c118 = arith.constant 118 : index
      %382 = memref.load %arg1[%c118] : memref<150xf32, #tpu.memory_space<smem>>
      %383 = vector.broadcast %382 : f32 to vector<1x128xf32>
      %384 = arith.mulf %383, %335 : vector<1x128xf32>
      %c119 = arith.constant 119 : index
      %385 = memref.load %arg1[%c119] : memref<150xf32, #tpu.memory_space<smem>>
      %386 = vector.broadcast %385 : f32 to vector<1x128xf32>
      %387 = arith.addf %384, %386 : vector<1x128xf32>
      %c120 = arith.constant 120 : index
      %388 = memref.load %arg1[%c120] : memref<150xf32, #tpu.memory_space<smem>>
      %389 = vector.broadcast %388 : f32 to vector<1x128xf32>
      %390 = arith.mulf %389, %336 : vector<1x128xf32>
      %391 = arith.addf %387, %390 : vector<1x128xf32>
      %c121 = arith.constant 121 : index
      %392 = memref.load %arg1[%c121] : memref<150xf32, #tpu.memory_space<smem>>
      %393 = vector.broadcast %392 : f32 to vector<1x128xf32>
      %394 = arith.mulf %393, %337 : vector<1x128xf32>
      %395 = arith.addf %391, %394 : vector<1x128xf32>
      %cst_54 = arith.constant 0.000000e+00 : f32
      %396 = vector.broadcast %cst_54 : f32 to vector<1x128xf32>
      %397 = arith.maximumf %395, %396 : vector<1x128xf32>
      %c2_55 = arith.constant 2 : index
      %c7_56 = arith.constant 7 : index
      %c0_57 = arith.constant 0 : index
      %398 = vector.load %arg2[%c2_55, %c7_56, %c0_57] : memref<10x8x128xf32, #tpu.memory_space<vmem>>, vector<1x1x128xf32>
      %399 = vector.shape_cast %398 : vector<1x1x128xf32> to vector<1x128xf32>
      %400 = vector.shape_cast %397 : vector<1x128xf32> to vector<1x1x128xf32>
      tpu.vector_store %arg2[%c2_55, %c7_56, %c0_57], %400 {strides = array<i32>} : memref<10x8x128xf32, #tpu.memory_space<vmem>>, vector<1x1x128xf32>,
      %c122 = arith.constant 122 : index
      %401 = memref.load %arg1[%c122] : memref<150xf32, #tpu.memory_space<smem>>
      %402 = vector.broadcast %401 : f32 to vector<1x128xf32>
      %403 = arith.mulf %402, %335 : vector<1x128xf32>
      %c123 = arith.constant 123 : index
      %404 = memref.load %arg1[%c123] : memref<150xf32, #tpu.memory_space<smem>>
      %405 = vector.broadcast %404 : f32 to vector<1x128xf32>
      %406 = arith.addf %403, %405 : vector<1x128xf32>
      %c124 = arith.constant 124 : index
      %407 = memref.load %arg1[%c124] : memref<150xf32, #tpu.memory_space<smem>>
      %408 = vector.broadcast %407 : f32 to vector<1x128xf32>
      %409 = arith.mulf %408, %336 : vector<1x128xf32>
      %410 = arith.addf %406, %409 : vector<1x128xf32>
      %c125 = arith.constant 125 : index
      %411 = memref.load %arg1[%c125] : memref<150xf32, #tpu.memory_space<smem>>
      %412 = vector.broadcast %411 : f32 to vector<1x128xf32>
      %413 = arith.mulf %412, %337 : vector<1x128xf32>
      %414 = arith.addf %410, %413 : vector<1x128xf32>
      %cst_58 = arith.constant 0.000000e+00 : f32
      %415 = vector.broadcast %cst_58 : f32 to vector<1x128xf32>
      %416 = arith.maximumf %414, %415 : vector<1x128xf32>
      %c3_59 = arith.constant 3 : index
      %c7_60 = arith.constant 7 : index
      %c0_61 = arith.constant 0 : index
      %417 = vector.load %arg2[%c3_59, %c7_60, %c0_61] : memref<10x8x128xf32, #tpu.memory_space<vmem>>, vector<1x1x128xf32>
      %418 = vector.shape_cast %417 : vector<1x1x128xf32> to vector<1x128xf32>
      %419 = vector.shape_cast %416 : vector<1x128xf32> to vector<1x1x128xf32>
      tpu.vector_store %arg2[%c3_59, %c7_60, %c0_61], %419 {strides = array<i32>} : memref<10x8x128xf32, #tpu.memory_space<vmem>>, vector<1x1x128xf32>,
      %c126 = arith.constant 126 : index
      %420 = memref.load %arg1[%c126] : memref<150xf32, #tpu.memory_space<smem>>
      %421 = vector.broadcast %420 : f32 to vector<1x128xf32>
      %422 = arith.mulf %421, %335 : vector<1x128xf32>
      %c127 = arith.constant 127 : index
      %423 = memref.load %arg1[%c127] : memref<150xf32, #tpu.memory_space<smem>>
      %424 = vector.broadcast %423 : f32 to vector<1x128xf32>
      %425 = arith.addf %422, %424 : vector<1x128xf32>
      %c128 = arith.constant 128 : index
      %426 = memref.load %arg1[%c128] : memref<150xf32, #tpu.memory_space<smem>>
      %427 = vector.broadcast %426 : f32 to vector<1x128xf32>
      %428 = arith.mulf %427, %336 : vector<1x128xf32>
      %429 = arith.addf %425, %428 : vector<1x128xf32>
      %c129 = arith.constant 129 : index
      %430 = memref.load %arg1[%c129] : memref<150xf32, #tpu.memory_space<smem>>
      %431 = vector.broadcast %430 : f32 to vector<1x128xf32>
      %432 = arith.mulf %431, %337 : vector<1x128xf32>
      %433 = arith.addf %429, %432 : vector<1x128xf32>
      %cst_62 = arith.constant 0.000000e+00 : f32
      %434 = vector.broadcast %cst_62 : f32 to vector<1x128xf32>
      %435 = arith.maximumf %433, %434 : vector<1x128xf32>
      %c4_63 = arith.constant 4 : index
      %c7_64 = arith.constant 7 : index
      %c0_65 = arith.constant 0 : index
      %436 = vector.load %arg2[%c4_63, %c7_64, %c0_65] : memref<10x8x128xf32, #tpu.memory_space<vmem>>, vector<1x1x128xf32>
      %437 = vector.shape_cast %436 : vector<1x1x128xf32> to vector<1x128xf32>
      %438 = vector.shape_cast %435 : vector<1x128xf32> to vector<1x1x128xf32>
      tpu.vector_store %arg2[%c4_63, %c7_64, %c0_65], %438 {strides = array<i32>} : memref<10x8x128xf32, #tpu.memory_space<vmem>>, vector<1x1x128xf32>,
      %c130 = arith.constant 130 : index
      %439 = memref.load %arg1[%c130] : memref<150xf32, #tpu.memory_space<smem>>
      %440 = vector.broadcast %439 : f32 to vector<1x128xf32>
      %441 = arith.mulf %440, %335 : vector<1x128xf32>
      %c131 = arith.constant 131 : index
      %442 = memref.load %arg1[%c131] : memref<150xf32, #tpu.memory_space<smem>>
      %443 = vector.broadcast %442 : f32 to vector<1x128xf32>
      %444 = arith.addf %441, %443 : vector<1x128xf32>
      %c132 = arith.constant 132 : index
      %445 = memref.load %arg1[%c132] : memref<150xf32, #tpu.memory_space<smem>>
      %446 = vector.broadcast %445 : f32 to vector<1x128xf32>
      %447 = arith.mulf %446, %336 : vector<1x128xf32>
      %448 = arith.addf %444, %447 : vector<1x128xf32>
      %c133 = arith.constant 133 : index
      %449 = memref.load %arg1[%c133] : memref<150xf32, #tpu.memory_space<smem>>
      %450 = vector.broadcast %449 : f32 to vector<1x128xf32>
      %451 = arith.mulf %450, %337 : vector<1x128xf32>
      %452 = arith.addf %448, %451 : vector<1x128xf32>
      %cst_66 = arith.constant 0.000000e+00 : f32
      %453 = vector.broadcast %cst_66 : f32 to vector<1x128xf32>
      %454 = arith.maximumf %452, %453 : vector<1x128xf32>
      %c5_67 = arith.constant 5 : index
      %c7_68 = arith.constant 7 : index
      %c0_69 = arith.constant 0 : index
      %455 = vector.load %arg2[%c5_67, %c7_68, %c0_69] : memref<10x8x128xf32, #tpu.memory_space<vmem>>, vector<1x1x128xf32>
      %456 = vector.shape_cast %455 : vector<1x1x128xf32> to vector<1x128xf32>
      %457 = vector.shape_cast %454 : vector<1x128xf32> to vector<1x1x128xf32>
      tpu.vector_store %arg2[%c5_67, %c7_68, %c0_69], %457 {strides = array<i32>} : memref<10x8x128xf32, #tpu.memory_space<vmem>>, vector<1x1x128xf32>,
      %c134 = arith.constant 134 : index
      %458 = memref.load %arg1[%c134] : memref<150xf32, #tpu.memory_space<smem>>
      %459 = vector.broadcast %458 : f32 to vector<1x128xf32>
      %460 = arith.mulf %459, %335 : vector<1x128xf32>
      %c135 = arith.constant 135 : index
      %461 = memref.load %arg1[%c135] : memref<150xf32, #tpu.memory_space<smem>>
      %462 = vector.broadcast %461 : f32 to vector<1x128xf32>
      %463 = arith.addf %460, %462 : vector<1x128xf32>
      %c136 = arith.constant 136 : index
      %464 = memref.load %arg1[%c136] : memref<150xf32, #tpu.memory_space<smem>>
      %465 = vector.broadcast %464 : f32 to vector<1x128xf32>
      %466 = arith.mulf %465, %336 : vector<1x128xf32>
      %467 = arith.addf %463, %466 : vector<1x128xf32>
      %c137 = arith.constant 137 : index
      %468 = memref.load %arg1[%c137] : memref<150xf32, #tpu.memory_space<smem>>
      %469 = vector.broadcast %468 : f32 to vector<1x128xf32>
      %470 = arith.mulf %469, %337 : vector<1x128xf32>
      %471 = arith.addf %467, %470 : vector<1x128xf32>
      %cst_70 = arith.constant 0.000000e+00 : f32
      %472 = vector.broadcast %cst_70 : f32 to vector<1x128xf32>
      %473 = arith.maximumf %471, %472 : vector<1x128xf32>
      %c6_71 = arith.constant 6 : index
      %c7_72 = arith.constant 7 : index
      %c0_73 = arith.constant 0 : index
      %474 = vector.load %arg2[%c6_71, %c7_72, %c0_73] : memref<10x8x128xf32, #tpu.memory_space<vmem>>, vector<1x1x128xf32>
      %475 = vector.shape_cast %474 : vector<1x1x128xf32> to vector<1x128xf32>
      %476 = vector.shape_cast %473 : vector<1x128xf32> to vector<1x1x128xf32>
      tpu.vector_store %arg2[%c6_71, %c7_72, %c0_73], %476 {strides = array<i32>} : memref<10x8x128xf32, #tpu.memory_space<vmem>>, vector<1x1x128xf32>,
      %c138 = arith.constant 138 : index
      %477 = memref.load %arg1[%c138] : memref<150xf32, #tpu.memory_space<smem>>
      %478 = vector.broadcast %477 : f32 to vector<1x128xf32>
      %479 = arith.mulf %478, %335 : vector<1x128xf32>
      %c139 = arith.constant 139 : index
      %480 = memref.load %arg1[%c139] : memref<150xf32, #tpu.memory_space<smem>>
      %481 = vector.broadcast %480 : f32 to vector<1x128xf32>
      %482 = arith.addf %479, %481 : vector<1x128xf32>
      %c140 = arith.constant 140 : index
      %483 = memref.load %arg1[%c140] : memref<150xf32, #tpu.memory_space<smem>>
      %484 = vector.broadcast %483 : f32 to vector<1x128xf32>
      %485 = arith.mulf %484, %336 : vector<1x128xf32>
      %486 = arith.addf %482, %485 : vector<1x128xf32>
      %c141 = arith.constant 141 : index
      %487 = memref.load %arg1[%c141] : memref<150xf32, #tpu.memory_space<smem>>
      %488 = vector.broadcast %487 : f32 to vector<1x128xf32>
      %489 = arith.mulf %488, %337 : vector<1x128xf32>
      %490 = arith.addf %486, %489 : vector<1x128xf32>
      %cst_74 = arith.constant 0.000000e+00 : f32
      %491 = vector.broadcast %cst_74 : f32 to vector<1x128xf32>
      %492 = arith.maximumf %490, %491 : vector<1x128xf32>
      %c7_75 = arith.constant 7 : index
      %c7_76 = arith.constant 7 : index
      %c0_77 = arith.constant 0 : index
      %493 = vector.load %arg2[%c7_75, %c7_76, %c0_77] : memref<10x8x128xf32, #tpu.memory_space<vmem>>, vector<1x1x128xf32>
      %494 = vector.shape_cast %493 : vector<1x1x128xf32> to vector<1x128xf32>
      %495 = vector.shape_cast %492 : vector<1x128xf32> to vector<1x1x128xf32>
      tpu.vector_store %arg2[%c7_75, %c7_76, %c0_77], %495 {strides = array<i32>} : memref<10x8x128xf32, #tpu.memory_space<vmem>>, vector<1x1x128xf32>,
      %c142 = arith.constant 142 : index
      %496 = memref.load %arg1[%c142] : memref<150xf32, #tpu.memory_space<smem>>
      %497 = vector.broadcast %496 : f32 to vector<1x128xf32>
      %498 = arith.mulf %497, %335 : vector<1x128xf32>
      %c143 = arith.constant 143 : index
      %499 = memref.load %arg1[%c143] : memref<150xf32, #tpu.memory_space<smem>>
      %500 = vector.broadcast %499 : f32 to vector<1x128xf32>
      %501 = arith.addf %498, %500 : vector<1x128xf32>
      %c144 = arith.constant 144 : index
      %502 = memref.load %arg1[%c144] : memref<150xf32, #tpu.memory_space<smem>>
      %503 = vector.broadcast %502 : f32 to vector<1x128xf32>
      %504 = arith.mulf %503, %336 : vector<1x128xf32>
      %505 = arith.addf %501, %504 : vector<1x128xf32>
      %c145 = arith.constant 145 : index
      %506 = memref.load %arg1[%c145] : memref<150xf32, #tpu.memory_space<smem>>
      %507 = vector.broadcast %506 : f32 to vector<1x128xf32>
      %508 = arith.mulf %507, %337 : vector<1x128xf32>
      %509 = arith.addf %505, %508 : vector<1x128xf32>
      %cst_78 = arith.constant 0.000000e+00 : f32
      %510 = vector.broadcast %cst_78 : f32 to vector<1x128xf32>
      %511 = arith.maximumf %509, %510 : vector<1x128xf32>
      %c8_79 = arith.constant 8 : index
      %c7_80 = arith.constant 7 : index
      %c0_81 = arith.constant 0 : index
      %512 = vector.load %arg2[%c8_79, %c7_80, %c0_81] : memref<10x8x128xf32, #tpu.memory_space<vmem>>, vector<1x1x128xf32>
      %513 = vector.shape_cast %512 : vector<1x1x128xf32> to vector<1x128xf32>
      %514 = vector.shape_cast %511 : vector<1x128xf32> to vector<1x1x128xf32>
      tpu.vector_store %arg2[%c8_79, %c7_80, %c0_81], %514 {strides = array<i32>} : memref<10x8x128xf32, #tpu.memory_space<vmem>>, vector<1x1x128xf32>,
      %c146 = arith.constant 146 : index
      %515 = memref.load %arg1[%c146] : memref<150xf32, #tpu.memory_space<smem>>
      %516 = vector.broadcast %515 : f32 to vector<1x128xf32>
      %517 = arith.mulf %516, %335 : vector<1x128xf32>
      %c147 = arith.constant 147 : index
      %518 = memref.load %arg1[%c147] : memref<150xf32, #tpu.memory_space<smem>>
      %519 = vector.broadcast %518 : f32 to vector<1x128xf32>
      %520 = arith.addf %517, %519 : vector<1x128xf32>
      %c148 = arith.constant 148 : index
      %521 = memref.load %arg1[%c148] : memref<150xf32, #tpu.memory_space<smem>>
      %522 = vector.broadcast %521 : f32 to vector<1x128xf32>
      %523 = arith.mulf %522, %336 : vector<1x128xf32>
      %524 = arith.addf %520, %523 : vector<1x128xf32>
      %c149 = arith.constant 149 : index
      %525 = memref.load %arg1[%c149] : memref<150xf32, #tpu.memory_space<smem>>
      %526 = vector.broadcast %525 : f32 to vector<1x128xf32>
      %527 = arith.mulf %526, %337 : vector<1x128xf32>
      %528 = arith.addf %524, %527 : vector<1x128xf32>
      %cst_82 = arith.constant 0.000000e+00 : f32
      %529 = vector.broadcast %cst_82 : f32 to vector<1x128xf32>
      %530 = arith.maximumf %528, %529 : vector<1x128xf32>
      %c9_83 = arith.constant 9 : index
      %c7_84 = arith.constant 7 : index
      %c0_85 = arith.constant 0 : index
      %531 = vector.load %arg2[%c9_83, %c7_84, %c0_85] : memref<10x8x128xf32, #tpu.memory_space<vmem>>, vector<1x1x128xf32>
      %532 = vector.shape_cast %531 : vector<1x1x128xf32> to vector<1x128xf32>
      %533 = vector.shape_cast %530 : vector<1x128xf32> to vector<1x1x128xf32>
      tpu.vector_store %arg2[%c9_83, %c7_84, %c0_85], %533 {strides = array<i32>} : memref<10x8x128xf32, #tpu.memory_space<vmem>>, vector<1x1x128xf32>,
    } else {
    }
    return
  }
  func.func @transform_0(%arg0: i32) -> i32 {
    %c0_i32 = arith.constant 0 : i32
    %c0_i32_0 = arith.constant 0 : i32
    return %c0_i32 : i32
  }
  func.func @transform_1(%arg0: i32) -> (i32, i32, i32) {
    %c0_i32 = arith.constant 0 : i32
    %c0_i32_0 = arith.constant 0 : i32
    %c0_i32_1 = arith.constant 0 : i32
    return %c0_i32, %arg0, %c0_i32_0 : i32, i32, i32
  }
}

</mosaic_0001>

<llo_original>
// kernel: tpu_custom_call.1
$region0: #{tpu_custom_call.1}
  #allocation0 [shape = 'u32[]', space=smem, size = 0x4, offset = 0x4, fixed_abs, tag = 'smem constant byte address 0x4 - core index']
  #allocation1 [shape = 'u32[144,128]{1,0:T(1,128)}', space=vmem, size = 0x12000, scoped, tag = 'internal scratch']
  %s0 = inlined_call_operand.hbm [shape: f32[150], index: 0, kind: input, shape index: {}]
  %s1 = inlined_call_operand.hbm [shape: f32[10,16,128], index: 1, kind: output, shape index: {}]
  %s2 = sld [smem:[#allocation0]]
  $region49: #{tpu_custom_call.1} parent=0
    _
  %s4 = ssub.s32 1, %s2
  %s5 = scalar_select 0, %s4, %s2
  $region1: #{tpu_custom_call.1} parent=0
    #allocation2 [shape = 'u8[1024]{0}', space=smem, size = 0x400, scoped, tag = 'input window, operand 0, single buffered']
    #allocation3 [shape = 's32[2]{0}', space=sflag, size = 0x8, scoped, tag = 'scoped memory for tpu_custom_call.1']
    #allocation4 [shape = 's32[2]{0}', space=sflag, size = 0x8, scoped, tag = 'scoped memory for tpu_custom_call.1']
    #allocation5 [shape = 'u8[81920]{0}', space=vmem, size = 0x14000, scoped, tag = 'output window, operand 0']
    %6 = vsyncpa [#allocation4], 0
    %7 = vsyncpa [#allocation3], 0
    %s8 = scalar_lea.sflag [#allocation3], 1
    %9 = vsyncpa %s8, 0
    loop: start=0, step=1, limit=4
    $region2: #{tpu_custom_call.1} parent=1 // loop_pre_header
      _
    $region3: #{tpu_custom_call.1} parent=1 // loop_header
      %s11 = sphi 0, %s15
      %p12 = scmp.ge.s32.totalorder %s11, 4
      %s19 = sphi 0, %s19
      %s21 = sphi 0, %s19
      %s22 = sphi 0, %s21
      %s36 = sphi 0, %s22
      %s42 = sphi 0, %s44
      %s45 = sphi 0, %s42
      %s46 = sphi 0, %s45
      %s62 = sphi 0, %s46
    $region4: #{tpu_custom_call.1} parent=1 // loop_header_branch
      %14 = sbr.rel (%p12) target = $region8
    $region5: #{tpu_custom_call.1} parent=1 // loop_body
      %s16 = ssub.s32 %s11, 1
      %s17 = ssub.s32 %s11, 2
      %s18 = sadd.s32 %s11, 1
      %s20 = sadd.s32 %s19, 1
      %p23 = scmp.eq.s32.totalorder %s11, 1
      %p24 = scmp.ne.s32.totalorder %s19, %s21
      %p25 = scmp.eq.s32.totalorder %s11, 0
      %p26 = por %p24, %p25
      %p27 = scmp.ne.s32.totalorder %s19, %s21
      %p28 = scmp.eq.s32.totalorder %s16, 1
      %p29 = por %p27, %p28
      %p30 = scmp.ne.s32.totalorder %s21, %s22
      %p31 = scmp.eq.s32.totalorder %s16, 0
      %p32 = por %p30, %p31
      %p33 = scmp.ne.s32.totalorder %s21, %s22
      %p34 = scmp.eq.s32.totalorder %s17, 1
      %p35 = por %p33, %p34
      %p37 = scmp.ne.s32.totalorder %s22, %s36
      %p38 = scmp.eq.s32.totalorder %s17, 0
      %p39 = por %p37, %p38
      %s40 = ssub.s32 %s11, %s18
      %p41 = scmp.eq.s32.totalorder %s40, 0
      %s43 = sadd.s32 %s42, 1
      %s44 = scalar_select %p41, %s42, %s43
      %p47 = pneg %p41
      %p48 = scmp.eq.s32.totalorder %s11, 1
      %p49 = por %p47, %p48
      %p50 = scmp.ne.s32.totalorder %s42, %s45
      %p51 = scmp.eq.s32.totalorder %s11, 0
      %p52 = por %p50, %p51
      %p53 = scmp.ne.s32.totalorder %s42, %s45
      %p54 = scmp.eq.s32.totalorder %s16, 1
      %p55 = por %p53, %p54
      %p56 = scmp.ne.s32.totalorder %s45, %s46
      %p57 = scmp.eq.s32.totalorder %s16, 0
      %p58 = por %p56, %p57
      %p59 = scmp.ne.s32.totalorder %s45, %s46
      %p60 = scmp.eq.s32.totalorder %s17, 1
      %p61 = por %p59, %p60
      %p63 = scmp.ne.s32.totalorder %s46, %s62
      %p64 = scmp.eq.s32.totalorder %s17, 0
      %p65 = por %p63, %p64
      %p66 = scmp.le.s32.totalorder 1, %s11
      %p67 = scmp.lt.s32.totalorder %s11, 3
      %p68 = pnand %p66, %p67
      %p69 = pneg %p68
      // Predicated region
      $region9: #{tpu_custom_call.1} parent=5 // pred_check
        _
      $region10: #{tpu_custom_call.1} parent=5 // pred_check_branch
        %71 = sbr.rel (%p68) target = $region12
      $region11: #{tpu_custom_call.1} parent=5 // pred_region
        %s72 = ssub.s32 %s11, 1
        // Predicated region
        $region13: #{tpu_custom_call.1} parent=11 // pred_check
          %p73 = pneg %p32
        $region14: #{tpu_custom_call.1} parent=11 // pred_check_branch
          %75 = sbr.rel (%p73) target = $region16
        $region15: #{tpu_custom_call.1} parent=11 // pred_region
          %s77 = ssub.s32 32, 32
          %78 = vsyncadd [#allocation4], %s77
          %81 = dma.hbm_to_smem %s0, 32, [#allocation2], [#allocation4]
        $region16: #{tpu_custom_call.1} parent=11 // pred_fallthru
          _
      $region12: #{tpu_custom_call.1} parent=5 // pred_fallthru
        _
      %p82 = scmp.lt.s32.totalorder %s11, 2
      // Predicated region
      $region17: #{tpu_custom_call.1} parent=5 // pred_check
        %p83 = pneg %p82
      $region18: #{tpu_custom_call.1} parent=5 // pred_check_branch
        %85 = sbr.rel (%p83) target = $region20
      $region19: #{tpu_custom_call.1} parent=5 // pred_region
        _
      $region20: #{tpu_custom_call.1} parent=5 // pred_fallthru
        _
      %p86 = scmp.le.s32.totalorder 1, %s11
      %p87 = scmp.lt.s32.totalorder %s11, 3
      %p88 = pnand %p86, %p87
      %p89 = pneg %p88
      // Predicated region
      $region21: #{tpu_custom_call.1} parent=5 // pred_check
        _
      $region22: #{tpu_custom_call.1} parent=5 // pred_check_branch
        %91 = sbr.rel (%p88) target = $region24
      $region23: #{tpu_custom_call.1} parent=5 // pred_region
        %s92 = ssub.s32 %s11, 1
        // Predicated region
        $region25: #{tpu_custom_call.1} parent=23 // pred_check
          %p93 = pneg %p32
        $region26: #{tpu_custom_call.1} parent=23 // pred_check_branch
          %95 = sbr.rel (%p93) target = $region28
        $region27: #{tpu_custom_call.1} parent=23 // pred_region
          %96 = dma.done [#allocation4], 32
        $region28: #{tpu_custom_call.1} parent=23 // pred_fallthru
          _
        %97 = sfence
        %p98 = pneg %p32
        %p99 = pneg %p29
        %p100 = pneg %p58
        %p101 = pneg %p55
        %s102 = sand.u32 %s45, 1
        %s103 = scalar_lea.sflag [#allocation3], %s102
        %s104 = sand.u32 %s45, 1
        %s105 = smul.addr %s104, 80
        %s106 = scalar_lea.vmem [#allocation5], %s105
        %v107 = vlaneseq
        %v108 = vand.u32 %v107, 127
        %v109 = vlaneseq
        %v110 = vshrl.u32 %v109, 7
        %v111 = vcvt.s32.f32 %v108
        %v112 = vmul.f32 %v111, 0.13333334
        %v113 = vadd.f32 %v112, -1.0
        %s114 = smul.u32 %s16, 8
        %v115 = vstv %s114
        %v116 = vadd.s32 %v115, %v110
        %v117 = vcvt.s32.f32 %v116
        %v118 = vmul.f32 %v117, 0.13333334
        %v119 = vadd.f32 %v118, -1.0
        %vm120 = vcmp.eq.s32.totalorder %v108, 0
        %v121 = vsel %vm120, 1, 0
        %v122 = vcvt.s32.f32 %v121
        %vm123 = vcmp.eq.s32.totalorder %v108, 15
        %v124 = vsel %vm123, 1, 0
        %v125 = vcvt.s32.f32 %v124
        %v126 = vmul.f32 %v122, %v119
        %v127 = vmul.f32 %v125, %v119
        %s128 = sld [smem:[#allocation2]]
        %v129 = vstv %s128
        %v130 = vmul.f32 %v129, %v113
        %s131 = sld [smem:[#allocation2 + $0x1]]
        %v132 = vstv %s131
        %v133 = vmul.f32 %v132, %v119
        %v134 = vadd.f32 %v130, %v133
        %s135 = sld [smem:[#allocation2 + $0x2]]
        %v136 = vstv %s135
        %v137 = vadd.f32 %v134, %v136
        %s138 = sld [smem:[#allocation2 + $0x3]]
        %v139 = vstv %s138
        %v140 = vmul.f32 %v139, %v126
        %v141 = vadd.f32 %v137, %v140
        %s142 = sld [smem:[#allocation2 + $0x4]]
        %v143 = vstv %s142
        %v144 = vmul.f32 %v143, %v122
        %v145 = vadd.f32 %v141, %v144
        %s146 = sld [smem:[#allocation2 + $0x5]]
        %v147 = vstv %s146
        %v148 = vmul.f32 %v147, %v127
        %v149 = vadd.f32 %v145, %v148
        %s150 = sld [smem:[#allocation2 + $0x6]]
        %v151 = vstv %s150
        %v152 = vmul.f32 %v151, %v125
        %v153 = vadd.f32 %v149, %v152
        %v154 = vmax.f32 %v153, 0.0
        %155 = vst [vmem:[%s106] sm:$0xff] %v154
        %s156 = sld [smem:[#allocation2 + $0x7]]
        %v157 = vstv %s156
        %v158 = vmul.f32 %v157, %v113
        %s159 = sld [smem:[#allocation2 + $0x8]]
        %v160 = vstv %s159
        %v161 = vmul.f32 %v160, %v119
        %v162 = vadd.f32 %v158, %v161
        %s163 = sld [smem:[#allocation2 + $0x9]]
        %v164 = vstv %s163
        %v165 = vadd.f32 %v162, %v164
        %s166 = sld [smem:[#allocation2 + $0xa]]
        %v167 = vstv %s166
        %v168 = vmul.f32 %v167, %v126
        %v169 = vadd.f32 %v165, %v168
        %s170 = sld [smem:[#allocation2 + $0xb]]
        %v171 = vstv %s170
        %v172 = vmul.f32 %v171, %v122
        %v173 = vadd.f32 %v169, %v172
        %s174 = sld [smem:[#allocation2 + $0xc]]
        %v175 = vstv %s174
        %v176 = vmul.f32 %v175, %v127
        %v177 = vadd.f32 %v173, %v176
        %s178 = sld [smem:[#allocation2 + $0xd]]
        %v179 = vstv %s178
        %v180 = vmul.f32 %v179, %v125
        %v181 = vadd.f32 %v177, %v180
        %v182 = vmax.f32 %v181, 0.0
        %s183 = scalar_lea.vmem %s106, 8 [#allocation5]
        %184 = vst [vmem:[%s183] sm:$0xff] %v182
        %s185 = sld [smem:[#allocation2 + $0xe]]
        %v186 = vstv %s185
        %v187 = vmul.f32 %v186, %v113
        %s188 = sld [smem:[#allocation2 + $0xf]]
        %v189 = vstv %s188
        %v190 = vmul.f32 %v189, %v119
        %v191 = vadd.f32 %v187, %v190
        %s192 = sld [smem:[#allocation2 + $0x10]]
        %v193 = vstv %s192
        %v194 = vadd.f32 %v191, %v193
        %s195 = sld [smem:[#allocation2 + $0x11]]
        %v196 = vstv %s195
        %v197 = vmul.f32 %v196, %v126
        %v198 = vadd.f32 %v194, %v197
        %s199 = sld [smem:[#allocation2 + $0x12]]
        %v200 = vstv %s199
        %v201 = vmul.f32 %v200, %v122
        %v202 = vadd.f32 %v198, %v201
        %s203 = sld [smem:[#allocation2 + $0x13]]
        %v204 = vstv %s203
        %v205 = vmul.f32 %v204, %v127
        %v206 = vadd.f32 %v202, %v205
        %s207 = sld [smem:[#allocation2 + $0x14]]
        %v208 = vstv %s207
        %v209 = vmul.f32 %v208, %v125
        %v210 = vadd.f32 %v206, %v209
        %v211 = vmax.f32 %v210, 0.0
        %s212 = scalar_lea.vmem %s106, 16 [#allocation5]
        %213 = vst [vmem:[%s212] sm:$0xff] %v211
        %s214 = sld [smem:[#allocation2 + $0x15]]
        %v215 = vstv %s214
        %v216 = vmul.f32 %v215, %v113
        %s217 = sld [smem:[#allocation2 + $0x16]]
        %v218 = vstv %s217
        %v219 = vmul.f32 %v218, %v119
        %v220 = vadd.f32 %v216, %v219
        %s221 = sld [smem:[#allocation2 + $0x17]]
        %v222 = vstv %s221
        %v223 = vadd.f32 %v220, %v222
        %s224 = sld [smem:[#allocation2 + $0x18]]
        %v225 = vstv %s224
        %v226 = vmul.f32 %v225, %v126
        %v227 = vadd.f32 %v223, %v226
        %s228 = sld [smem:[#allocation2 + $0x19]]
        %v229 = vstv %s228
        %v230 = vmul.f32 %v229, %v122
        %v231 = vadd.f32 %v227, %v230
        %s232 = sld [smem:[#allocation2 + $0x1a]]
        %v233 = vstv %s232
        %v234 = vmul.f32 %v233, %v127
        %v235 = vadd.f32 %v231, %v234
        %s236 = sld [smem:[#allocation2 + $0x1b]]
        %v237 = vstv %s236
        %v238 = vmul.f32 %v237, %v125
        %v239 = vadd.f32 %v235, %v238
        %v240 = vmax.f32 %v239, 0.0
        %s241 = scalar_lea.vmem %s106, 24 [#allocation5]
        %242 = vst [vmem:[%s241] sm:$0xff] %v240
        %s243 = sld [smem:[#allocation2 + $0x1c]]
        %v244 = vstv %s243
        %v245 = vmul.f32 %v244, %v113
        %s246 = sld [smem:[#allocation2 + $0x1d]]
        %v247 = vstv %s246
        %v248 = vmul.f32 %v247, %v119
        %v249 = vadd.f32 %v245, %v248
        %s250 = sld [smem:[#allocation2 + $0x1e]]
        %v251 = vstv %s250
        %v252 = vadd.f32 %v249, %v251
        %s253 = sld [smem:[#allocation2 + $0x1f]]
        %v254 = vstv %s253
        %v255 = vmul.f32 %v254, %v126
        %v256 = vadd.f32 %v252, %v255
        %s257 = sld [smem:[#allocation2 + $0x20]]
        %v258 = vstv %s257
        %v259 = vmul.f32 %v258, %v122
        %v260 = vadd.f32 %v256, %v259
        %s261 = sld [smem:[#allocation2 + $0x21]]
        %v262 = vstv %s261
        %v263 = vmul.f32 %v262, %v127
        %v264 = vadd.f32 %v260, %v263
        %s265 = sld [smem:[#allocation2 + $0x22]]
        %v266 = vstv %s265
        %v267 = vmul.f32 %v266, %v125
        %v268 = vadd.f32 %v264, %v267
        %v269 = vmax.f32 %v268, 0.0
        %s270 = scalar_lea.vmem %s106, 32 [#allocation5]
        %271 = vst [vmem:[%s270] sm:$0xff] %v269
        %s272 = sld [smem:[#allocation2 + $0x23]]
        %v273 = vstv %s272
        %v274 = vmul.f32 %v273, %v113
        %s275 = sld [smem:[#allocation2 + $0x24]]
        %v276 = vstv %s275
        %v277 = vmul.f32 %v276, %v119
        %v278 = vadd.f32 %v274, %v277
        %s279 = sld [smem:[#allocation2 + $0x25]]
        %v280 = vstv %s279
        %v281 = vadd.f32 %v278, %v280
        %s282 = sld [smem:[#allocation2 + $0x26]]
        %v283 = vstv %s282
        %v284 = vmul.f32 %v283, %v126
        %v285 = vadd.f32 %v281, %v284
        %s286 = sld [smem:[#allocation2 + $0x27]]
        %v287 = vstv %s286
        %v288 = vmul.f32 %v287, %v122
        %v289 = vadd.f32 %v285, %v288
        %s290 = sld [smem:[#allocation2 + $0x28]]
        %v291 = vstv %s290
        %v292 = vmul.f32 %v291, %v127
        %v293 = vadd.f32 %v289, %v292
        %s294 = sld [smem:[#allocation2 + $0x29]]
        %v295 = vstv %s294
        %v296 = vmul.f32 %v295, %v125
        %v297 = vadd.f32 %v293, %v296
        %v298 = vmax.f32 %v297, 0.0
        %s299 = scalar_lea.vmem %s106, 40 [#allocation5]
        %300 = vst [vmem:[%s299] sm:$0xff] %v298
        %s301 = sld [smem:[#allocation2 + $0x2a]]
        %v302 = vstv %s301
        %v303 = vmul.f32 %v302, %v113
        %s304 = sld [smem:[#allocation2 + $0x2b]]
        %v305 = vstv %s304
        %v306 = vmul.f32 %v305, %v119
        %v307 = vadd.f32 %v303, %v306
        %s308 = sld [smem:[#allocation2 + $0x2c]]
        %v309 = vstv %s308
        %v310 = vadd.f32 %v307, %v309
        %s311 = sld [smem:[#allocation2 + $0x2d]]
        %v312 = vstv %s311
        %v313 = vmul.f32 %v312, %v126
        %v314 = vadd.f32 %v310, %v313
        %s315 = sld [smem:[#allocation2 + $0x2e]]
        %v316 = vstv %s315
        %v317 = vmul.f32 %v316, %v122
        %v318 = vadd.f32 %v314, %v317
        %s319 = sld [smem:[#allocation2 + $0x2f]]
        %v320 = vstv %s319
        %v321 = vmul.f32 %v320, %v127
        %v322 = vadd.f32 %v318, %v321
        %s323 = sld [smem:[#allocation2 + $0x30]]
        %v324 = vstv %s323
        %v325 = vmul.f32 %v324, %v125
        %v326 = vadd.f32 %v322, %v325
        %v327 = vmax.f32 %v326, 0.0
        %s328 = scalar_lea.vmem %s106, 48 [#allocation5]
        %329 = vst [vmem:[%s328] sm:$0xff] %v327
        %s330 = sld [smem:[#allocation2 + $0x31]]
        %v331 = vstv %s330
        %v332 = vmul.f32 %v331, %v113
        %s333 = sld [smem:[#allocation2 + $0x32]]
        %v334 = vstv %s333
        %v335 = vmul.f32 %v334, %v119
        %v336 = vadd.f32 %v332, %v335
        %s337 = sld [smem:[#allocation2 + $0x33]]
        %v338 = vstv %s337
        %v339 = vadd.f32 %v336, %v338
        %s340 = sld [smem:[#allocation2 + $0x34]]
        %v341 = vstv %s340
        %v342 = vmul.f32 %v341, %v126
        %v343 = vadd.f32 %v339, %v342
        %s344 = sld [smem:[#allocation2 + $0x35]]
        %v345 = vstv %s344
        %v346 = vmul.f32 %v345, %v122
        %v347 = vadd.f32 %v343, %v346
        %s348 = sld [smem:[#allocation2 + $0x36]]
        %v349 = vstv %s348
        %v350 = vmul.f32 %v349, %v127
        %v351 = vadd.f32 %v347, %v350
        %s352 = sld [smem:[#allocation2 + $0x37]]
        %v353 = vstv %s352
        %v354 = vmul.f32 %v353, %v125
        %v355 = vadd.f32 %v351, %v354
        %v356 = vmax.f32 %v355, 0.0
        %s357 = scalar_lea.vmem %s106, 56 [#allocation5]
        %358 = vst [vmem:[%s357] sm:$0xff] %v356
        %s359 = sld [smem:[#allocation2 + $0x38]]
        %v360 = vstv %s359
        %v361 = vmul.f32 %v360, %v113
        %s362 = sld [smem:[#allocation2 + $0x39]]
        %v363 = vstv %s362
        %v364 = vmul.f32 %v363, %v119
        %v365 = vadd.f32 %v361, %v364
        %s366 = sld [smem:[#allocation2 + $0x3a]]
        %v367 = vstv %s366
        %v368 = vadd.f32 %v365, %v367
        %s369 = sld [smem:[#allocation2 + $0x3b]]
        %v370 = vstv %s369
        %v371 = vmul.f32 %v370, %v126
        %v372 = vadd.f32 %v368, %v371
        %s373 = sld [smem:[#allocation2 + $0x3c]]
        %v374 = vstv %s373
        %v375 = vmul.f32 %v374, %v122
        %v376 = vadd.f32 %v372, %v375
        %s377 = sld [smem:[#allocation2 + $0x3d]]
        %v378 = vstv %s377
        %v379 = vmul.f32 %v378, %v127
        %v380 = vadd.f32 %v376, %v379
        %s381 = sld [smem:[#allocation2 + $0x3e]]
        %v382 = vstv %s381
        %v383 = vmul.f32 %v382, %v125
        %v384 = vadd.f32 %v380, %v383
        %v385 = vmax.f32 %v384, 0.0
        %s386 = scalar_lea.vmem %s106, 64 [#allocation5]
        %387 = vst [vmem:[%s386] sm:$0xff] %v385
        %s388 = sld [smem:[#allocation2 + $0x3f]]
        %v389 = vstv %s388
        %v390 = vmul.f32 %v389, %v113
        %s391 = sld [smem:[#allocation2 + $0x40]]
        %v392 = vstv %s391
        %v393 = vmul.f32 %v392, %v119
        %v394 = vadd.f32 %v390, %v393
        %s395 = sld [smem:[#allocation2 + $0x41]]
        %v396 = vstv %s395
        %v397 = vadd.f32 %v394, %v396
        %s398 = sld [smem:[#allocation2 + $0x42]]
        %v399 = vstv %s398
        %v400 = vmul.f32 %v399, %v126
        %v401 = vadd.f32 %v397, %v400
        %s402 = sld [smem:[#allocation2 + $0x43]]
        %v403 = vstv %s402
        %v404 = vmul.f32 %v403, %v122
        %v405 = vadd.f32 %v401, %v404
        %s406 = sld [smem:[#allocation2 + $0x44]]
        %v407 = vstv %s406
        %v408 = vmul.f32 %v407, %v127
        %v409 = vadd.f32 %v405, %v408
        %s410 = sld [smem:[#allocation2 + $0x45]]
        %v411 = vstv %s410
        %v412 = vmul.f32 %v411, %v125
        %v413 = vadd.f32 %v409, %v412
        %v414 = vmax.f32 %v413, 0.0
        %s415 = scalar_lea.vmem %s106, 72 [#allocation5]
        %416 = vst [vmem:[%s415] sm:$0xff] %v414
        %p417 = scmp.eq.s32.totalorder %s16, 0
        // Predicated region
        $region29: #{tpu_custom_call.1} parent=23 // pred_check
          %p418 = pneg %p417
        $region30: #{tpu_custom_call.1} parent=23 // pred_check_branch
          %420 = sbr.rel (%p418) target = $region32
        $region31: #{tpu_custom_call.1} parent=23 // pred_region
          %s421 = sld [smem:[#allocation2 + $0x46]]
          %v422 = vstv %s421
          %v423 = vmul.f32 %v422, %v113
          %s424 = sld [smem:[#allocation2 + $0x47]]
          %v425 = vstv %s424
          %v426 = vadd.f32 %v423, %v425
          %s427 = sld [smem:[#allocation2 + $0x48]]
          %v428 = vstv %s427
          %v429 = vmul.f32 %v428, %v122
          %v430 = vadd.f32 %v426, %v429
          %s431 = sld [smem:[#allocation2 + $0x49]]
          %v432 = vstv %s431
          %v433 = vmul.f32 %v432, %v125
          %v434 = vadd.f32 %v430, %v433
          %v435 = vmax.f32 %v434, 0.0
          %436 = vst [vmem:[%s106] sm:$0x1] %v435
          %s437 = sld [smem:[#allocation2 + $0x4a]]
          %v438 = vstv %s437
          %v439 = vmul.f32 %v438, %v113
          %s440 = sld [smem:[#allocation2 + $0x4b]]
          %v441 = vstv %s440
          %v442 = vadd.f32 %v439, %v441
          %s443 = sld [smem:[#allocation2 + $0x4c]]
          %v444 = vstv %s443
          %v445 = vmul.f32 %v444, %v122
          %v446 = vadd.f32 %v442, %v445
          %s447 = sld [smem:[#allocation2 + $0x4d]]
          %v448 = vstv %s447
          %v449 = vmul.f32 %v448, %v125
          %v450 = vadd.f32 %v446, %v449
          %v451 = vmax.f32 %v450, 0.0
          %452 = vst [vmem:[%s183] sm:$0x1] %v451
          %s453 = sld [smem:[#allocation2 + $0x4e]]
          %v454 = vstv %s453
          %v455 = vmul.f32 %v454, %v113
          %s456 = sld [smem:[#allocation2 + $0x4f]]
          %v457 = vstv %s456
          %v458 = vadd.f32 %v455, %v457
          %s459 = sld [smem:[#allocation2 + $0x50]]
          %v460 = vstv %s459
          %v461 = vmul.f32 %v460, %v122
          %v462 = vadd.f32 %v458, %v461
          %s463 = sld [smem:[#allocation2 + $0x51]]
          %v464 = vstv %s463
          %v465 = vmul.f32 %v464, %v125
          %v466 = vadd.f32 %v462, %v465
          %v467 = vmax.f32 %v466, 0.0
          %468 = vst [vmem:[%s212] sm:$0x1] %v467
          %s469 = sld [smem:[#allocation2 + $0x52]]
          %v470 = vstv %s469
          %v471 = vmul.f32 %v470, %v113
          %s472 = sld [smem:[#allocation2 + $0x53]]
          %v473 = vstv %s472
          %v474 = vadd.f32 %v471, %v473
          %s475 = sld [smem:[#allocation2 + $0x54]]
          %v476 = vstv %s475
          %v477 = vmul.f32 %v476, %v122
          %v478 = vadd.f32 %v474, %v477
          %s479 = sld [smem:[#allocation2 + $0x55]]
          %v480 = vstv %s479
          %v481 = vmul.f32 %v480, %v125
          %v482 = vadd.f32 %v478, %v481
          %v483 = vmax.f32 %v482, 0.0
          %484 = vst [vmem:[%s241] sm:$0x1] %v483
          %s485 = sld [smem:[#allocation2 + $0x56]]
          %v486 = vstv %s485
          %v487 = vmul.f32 %v486, %v113
          %s488 = sld [smem:[#allocation2 + $0x57]]
          %v489 = vstv %s488
          %v490 = vadd.f32 %v487, %v489
          %s491 = sld [smem:[#allocation2 + $0x58]]
          %v492 = vstv %s491
          %v493 = vmul.f32 %v492, %v122
          %v494 = vadd.f32 %v490, %v493
          %s495 = sld [smem:[#allocation2 + $0x59]]
          %v496 = vstv %s495
          %v497 = vmul.f32 %v496, %v125
          %v498 = vadd.f32 %v494, %v497
          %v499 = vmax.f32 %v498, 0.0
          %500 = vst [vmem:[%s270] sm:$0x1] %v499
          %s501 = sld [smem:[#allocation2 + $0x5a]]
          %v502 = vstv %s501
          %v503 = vmul.f32 %v502, %v113
          %s504 = sld [smem:[#allocation2 + $0x5b]]
          %v505 = vstv %s504
          %v506 = vadd.f32 %v503, %v505
          %s507 = sld [smem:[#allocation2 + $0x5c]]
          %v508 = vstv %s507
          %v509 = vmul.f32 %v508, %v122
          %v510 = vadd.f32 %v506, %v509
          %s511 = sld [smem:[#allocation2 + $0x5d]]
          %v512 = vstv %s511
          %v513 = vmul.f32 %v512, %v125
          %v514 = vadd.f32 %v510, %v513
          %v515 = vmax.f32 %v514, 0.0
          %516 = vst [vmem:[%s299] sm:$0x1] %v515
          %s517 = sld [smem:[#allocation2 + $0x5e]]
          %v518 = vstv %s517
          %v519 = vmul.f32 %v518, %v113
          %s520 = sld [smem:[#allocation2 + $0x5f]]
          %v521 = vstv %s520
          %v522 = vadd.f32 %v519, %v521
          %s523 = sld [smem:[#allocation2 + $0x60]]
          %v524 = vstv %s523
          %v525 = vmul.f32 %v524, %v122
          %v526 = vadd.f32 %v522, %v525
          %s527 = sld [smem:[#allocation2 + $0x61]]
          %v528 = vstv %s527
          %v529 = vmul.f32 %v528, %v125
          %v530 = vadd.f32 %v526, %v529
          %v531 = vmax.f32 %v530, 0.0
          %532 = vst [vmem:[%s328] sm:$0x1] %v531
          %s533 = sld [smem:[#allocation2 + $0x62]]
          %v534 = vstv %s533
          %v535 = vmul.f32 %v534, %v113
          %s536 = sld [smem:[#allocation2 + $0x63]]
          %v537 = vstv %s536
          %v538 = vadd.f32 %v535, %v537
          %s539 = sld [smem:[#allocation2 + $0x64]]
          %v540 = vstv %s539
          %v541 = vmul.f32 %v540, %v122
          %v542 = vadd.f32 %v538, %v541
          %s543 = sld [smem:[#allocation2 + $0x65]]
          %v544 = vstv %s543
          %v545 = vmul.f32 %v544, %v125
          %v546 = vadd.f32 %v542, %v545
          %v547 = vmax.f32 %v546, 0.0
          %548 = vst [vmem:[%s357] sm:$0x1] %v547
          %s549 = sld [smem:[#allocation2 + $0x66]]
          %v550 = vstv %s549
          %v551 = vmul.f32 %v550, %v113
          %s552 = sld [smem:[#allocation2 + $0x67]]
          %v553 = vstv %s552
          %v554 = vadd.f32 %v551, %v553
          %s555 = sld [smem:[#allocation2 + $0x68]]
          %v556 = vstv %s555
          %v557 = vmul.f32 %v556, %v122
          %v558 = vadd.f32 %v554, %v557
          %s559 = sld [smem:[#allocation2 + $0x69]]
          %v560 = vstv %s559
          %v561 = vmul.f32 %v560, %v125
          %v562 = vadd.f32 %v558, %v561
          %v563 = vmax.f32 %v562, 0.0
          %564 = vst [vmem:[%s386] sm:$0x1] %v563
          %s565 = sld [smem:[#allocation2 + $0x6a]]
          %v566 = vstv %s565
          %v567 = vmul.f32 %v566, %v113
          %s568 = sld [smem:[#allocation2 + $0x6b]]
          %v569 = vstv %s568
          %v570 = vadd.f32 %v567, %v569
          %s571 = sld [smem:[#allocation2 + $0x6c]]
          %v572 = vstv %s571
          %v573 = vmul.f32 %v572, %v122
          %v574 = vadd.f32 %v570, %v573
          %s575 = sld [smem:[#allocation2 + $0x6d]]
          %v576 = vstv %s575
          %v577 = vmul.f32 %v576, %v125
          %v578 = vadd.f32 %v574, %v577
          %v579 = vmax.f32 %v578, 0.0
          %580 = vst [vmem:[%s415] sm:$0x1] %v579
        $region32: #{tpu_custom_call.1} parent=23 // pred_fallthru
          _
        %p581 = scmp.eq.s32.totalorder %s16, 1
        // Predicated region
        $region33: #{tpu_custom_call.1} parent=23 // pred_check
          %p582 = pneg %p581
        $region34: #{tpu_custom_call.1} parent=23 // pred_check_branch
          %584 = sbr.rel (%p582) target = $region36
        $region35: #{tpu_custom_call.1} parent=23 // pred_region
          %s585 = sld [smem:[#allocation2 + $0x6e]]
          %v586 = vstv %s585
          %v587 = vmul.f32 %v586, %v113
          %s588 = sld [smem:[#allocation2 + $0x6f]]
          %v589 = vstv %s588
          %v590 = vadd.f32 %v587, %v589
          %s591 = sld [smem:[#allocation2 + $0x70]]
          %v592 = vstv %s591
          %v593 = vmul.f32 %v592, %v122
          %v594 = vadd.f32 %v590, %v593
          %s595 = sld [smem:[#allocation2 + $0x71]]
          %v596 = vstv %s595
          %v597 = vmul.f32 %v596, %v125
          %v598 = vadd.f32 %v594, %v597
          %v599 = vmax.f32 %v598, 0.0
          %600 = vst [vmem:[%s106 + $0x7] sm:$0x1] %v599
          %s601 = sld [smem:[#allocation2 + $0x72]]
          %v602 = vstv %s601
          %v603 = vmul.f32 %v602, %v113
          %s604 = sld [smem:[#allocation2 + $0x73]]
          %v605 = vstv %s604
          %v606 = vadd.f32 %v603, %v605
          %s607 = sld [smem:[#allocation2 + $0x74]]
          %v608 = vstv %s607
          %v609 = vmul.f32 %v608, %v122
          %v610 = vadd.f32 %v606, %v609
          %s611 = sld [smem:[#allocation2 + $0x75]]
          %v612 = vstv %s611
          %v613 = vmul.f32 %v612, %v125
          %v614 = vadd.f32 %v610, %v613
          %v615 = vmax.f32 %v614, 0.0
          %616 = vst [vmem:[%s183 + $0x7] sm:$0x1] %v615
          %s617 = sld [smem:[#allocation2 + $0x76]]
          %v618 = vstv %s617
          %v619 = vmul.f32 %v618, %v113
          %s620 = sld [smem:[#allocation2 + $0x77]]
          %v621 = vstv %s620
          %v622 = vadd.f32 %v619, %v621
          %s623 = sld [smem:[#allocation2 + $0x78]]
          %v624 = vstv %s623
          %v625 = vmul.f32 %v624, %v122
          %v626 = vadd.f32 %v622, %v625
          %s627 = sld [smem:[#allocation2 + $0x79]]
          %v628 = vstv %s627
          %v629 = vmul.f32 %v628, %v125
          %v630 = vadd.f32 %v626, %v629
          %v631 = vmax.f32 %v630, 0.0
          %632 = vst [vmem:[%s212 + $0x7] sm:$0x1] %v631
          %s633 = sld [smem:[#allocation2 + $0x7a]]
          %v634 = vstv %s633
          %v635 = vmul.f32 %v634, %v113
          %s636 = sld [smem:[#allocation2 + $0x7b]]
          %v637 = vstv %s636
          %v638 = vadd.f32 %v635, %v637
          %s639 = sld [smem:[#allocation2 + $0x7c]]
          %v640 = vstv %s639
          %v641 = vmul.f32 %v640, %v122
          %v642 = vadd.f32 %v638, %v641
          %s643 = sld [smem:[#allocation2 + $0x7d]]
          %v644 = vstv %s643
          %v645 = vmul.f32 %v644, %v125
          %v646 = vadd.f32 %v642, %v645
          %v647 = vmax.f32 %v646, 0.0
          %648 = vst [vmem:[%s241 + $0x7] sm:$0x1] %v647
          %s649 = sld [smem:[#allocation2 + $0x7e]]
          %v650 = vstv %s649
          %v651 = vmul.f32 %v650, %v113
          %s652 = sld [smem:[#allocation2 + $0x7f]]
          %v653 = vstv %s652
          %v654 = vadd.f32 %v651, %v653
          %s655 = sld [smem:[#allocation2 + $0x80]]
          %v656 = vstv %s655
          %v657 = vmul.f32 %v656, %v122
          %v658 = vadd.f32 %v654, %v657
          %s659 = sld [smem:[#allocation2 + $0x81]]
          %v660 = vstv %s659
          %v661 = vmul.f32 %v660, %v125
          %v662 = vadd.f32 %v658, %v661
          %v663 = vmax.f32 %v662, 0.0
          %664 = vst [vmem:[%s270 + $0x7] sm:$0x1] %v663
          %s665 = sld [smem:[#allocation2 + $0x82]]
          %v666 = vstv %s665
          %v667 = vmul.f32 %v666, %v113
          %s668 = sld [smem:[#allocation2 + $0x83]]
          %v669 = vstv %s668
          %v670 = vadd.f32 %v667, %v669
          %s671 = sld [smem:[#allocation2 + $0x84]]
          %v672 = vstv %s671
          %v673 = vmul.f32 %v672, %v122
          %v674 = vadd.f32 %v670, %v673
          %s675 = sld [smem:[#allocation2 + $0x85]]
          %v676 = vstv %s675
          %v677 = vmul.f32 %v676, %v125
          %v678 = vadd.f32 %v674, %v677
          %v679 = vmax.f32 %v678, 0.0
          %680 = vst [vmem:[%s299 + $0x7] sm:$0x1] %v679
          %s681 = sld [smem:[#allocation2 + $0x86]]
          %v682 = vstv %s681
          %v683 = vmul.f32 %v682, %v113
          %s684 = sld [smem:[#allocation2 + $0x87]]
          %v685 = vstv %s684
          %v686 = vadd.f32 %v683, %v685
          %s687 = sld [smem:[#allocation2 + $0x88]]
          %v688 = vstv %s687
          %v689 = vmul.f32 %v688, %v122
          %v690 = vadd.f32 %v686, %v689
          %s691 = sld [smem:[#allocation2 + $0x89]]
          %v692 = vstv %s691
          %v693 = vmul.f32 %v692, %v125
          %v694 = vadd.f32 %v690, %v693
          %v695 = vmax.f32 %v694, 0.0
          %696 = vst [vmem:[%s328 + $0x7] sm:$0x1] %v695
          %s697 = sld [smem:[#allocation2 + $0x8a]]
          %v698 = vstv %s697
          %v699 = vmul.f32 %v698, %v113
          %s700 = sld [smem:[#allocation2 + $0x8b]]
          %v701 = vstv %s700
          %v702 = vadd.f32 %v699, %v701
          %s703 = sld [smem:[#allocation2 + $0x8c]]
          %v704 = vstv %s703
          %v705 = vmul.f32 %v704, %v122
          %v706 = vadd.f32 %v702, %v705
          %s707 = sld [smem:[#allocation2 + $0x8d]]
          %v708 = vstv %s707
          %v709 = vmul.f32 %v708, %v125
          %v710 = vadd.f32 %v706, %v709
          %v711 = vmax.f32 %v710, 0.0
          %712 = vst [vmem:[%s357 + $0x7] sm:$0x1] %v711
          %s713 = sld [smem:[#allocation2 + $0x8e]]
          %v714 = vstv %s713
          %v715 = vmul.f32 %v714, %v113
          %s716 = sld [smem:[#allocation2 + $0x8f]]
          %v717 = vstv %s716
          %v718 = vadd.f32 %v715, %v717
          %s719 = sld [smem:[#allocation2 + $0x90]]
          %v720 = vstv %s719
          %v721 = vmul.f32 %v720, %v122
          %v722 = vadd.f32 %v718, %v721
          %s723 = sld [smem:[#allocation2 + $0x91]]
          %v724 = vstv %s723
          %v725 = vmul.f32 %v724, %v125
          %v726 = vadd.f32 %v722, %v725
          %v727 = vmax.f32 %v726, 0.0
          %728 = vst [vmem:[%s386 + $0x7] sm:$0x1] %v727
          %s729 = sld [smem:[#allocation2 + $0x92]]
          %v730 = vstv %s729
          %v731 = vmul.f32 %v730, %v113
          %s732 = sld [smem:[#allocation2 + $0x93]]
          %v733 = vstv %s732
          %v734 = vadd.f32 %v731, %v733
          %s735 = sld [smem:[#allocation2 + $0x94]]
          %v736 = vstv %s735
          %v737 = vmul.f32 %v736, %v122
          %v738 = vadd.f32 %v734, %v737
          %s739 = sld [smem:[#allocation2 + $0x95]]
          %v740 = vstv %s739
          %v741 = vmul.f32 %v740, %v125
          %v742 = vadd.f32 %v738, %v741
          %v743 = vmax.f32 %v742, 0.0
          %744 = vst [vmem:[%s415 + $0x7] sm:$0x1] %v743
        $region36: #{tpu_custom_call.1} parent=23 // pred_fallthru
          _
        %s745 = sand.u32 %s45, 1
        %s746 = scalar_lea.sflag [#allocation3], %s745
        %s747 = sand.u32 %s45, 1
        %s748 = smul.addr %s747, 80
        %s749 = scalar_lea.vmem [#allocation5], %s748
        // Predicated region
        $region37: #{tpu_custom_call.1} parent=23 // pred_check
          %p750 = pneg %p55
        $region38: #{tpu_custom_call.1} parent=23 // pred_check_branch
          %752 = sbr.rel (%p750) target = $region40
        $region39: #{tpu_custom_call.1} parent=23 // pred_region
          %s754 = ssub.s32 1280, 1280
          %755 = vsyncadd %s746, %s754
          %s756 = smul.addr %s16, 128
          %s757 = scalar_lea.hbm %s1, %s756
          %s758 = sshll.u32 %s749, 4
          %s759 = int_to_ptr.vmem [resolvable:$true] %s758
          %764 = dma.vmem_to_hbm [thread:$0]  %s759, 1280, %s757, %s746, 128, 256, 8
        $region40: #{tpu_custom_call.1} parent=23 // pred_fallthru
          _
      $region24: #{tpu_custom_call.1} parent=5 // pred_fallthru
        _
      %p765 = scmp.le.s32.totalorder 2, %s11
      // Predicated region
      $region41: #{tpu_custom_call.1} parent=5 // pred_check
        %p766 = pneg %p765
      $region42: #{tpu_custom_call.1} parent=5 // pred_check_branch
        %768 = sbr.rel (%p766) target = $region44
      $region43: #{tpu_custom_call.1} parent=5 // pred_region
        %s769 = ssub.s32 %s11, 2
        // Predicated region
        $region45: #{tpu_custom_call.1} parent=43 // pred_check
          %p770 = pneg %p61
        $region46: #{tpu_custom_call.1} parent=43 // pred_check_branch
          %772 = sbr.rel (%p770) target = $region48
        $region47: #{tpu_custom_call.1} parent=43 // pred_region
          %s773 = sand.u32 %s46, 1
          %s774 = scalar_lea.sflag [#allocation3], %s773
          %s775 = sand.u32 %s46, 1
          %s776 = smul.addr %s775, 80
          %s777 = scalar_lea.vmem [#allocation5], %s776
          %778 = dma.done %s774, 1280
        $region48: #{tpu_custom_call.1} parent=43 // pred_fallthru
          _
      $region44: #{tpu_custom_call.1} parent=5 // pred_fallthru
        _
    $region6: #{tpu_custom_call.1} parent=1 // loop_footer
      %s15 = sadd.s32 1, %s11
    $region7: #{tpu_custom_call.1} parent=1 // loop_footer_branch
      %10 = sbr.rel target = $region3
    $region8: #{tpu_custom_call.1} parent=1 // loop_exit
      _
    %779 = vsyncpa [#allocation3], 1
    %s780 = scalar_lea.sflag [#allocation3], 1
    %781 = vsyncpa %s780, 1
    %782 = vsyncpa [#allocation4], 1
    %s783 = scalar_lea.sflag [#allocation4], 1
    %784 = vsyncpa %s783, 1

</llo_original>
